<compile_context>
chip_gen: v6e
topology: v6e:2x2x1
jax: 0.10.0
libtpu: 0.0.40
codegen_flags: <defaults>
</compile_context>

<pallas_src>
import functools

import jax
import jax.numpy as jnp
from jax.experimental import pallas as pl
from jax.experimental.pallas import tpu as pltpu

BN_EPS = 1e-5


def _clfe_kernel(x_ref, wm_ref, b1_ref, gb_ref, o_ref, *, hw, fold):
    # x_ref : (B, rows, L) f32   L = fold*hw  (fold==2 -> two channels / row)
    # wm_ref: (fold, 1, L) f32   row 0 = lin1 weight (tiled), row 1 = hi-mask
    # b1_ref: (1,)         f32   lin1 bias (SMEM scalar)
    # gb_ref: (rows, 2*fold) f32 per-row packed gamma/beta
    # o_ref : (B, rows, L) f32
    x = x_ref[...]
    B, rows, _ = x.shape
    b1 = b1_ref[0]
    inv_n = 1.0 / (B * hw)          # BN count per channel = B*H*W

    w = wm_ref[0:1, :, :]           # (1, 1, L) broadcast weight row
    xw = x * w
    xx = x * x

    if fold == 2:
        m = wm_ref[1:2, :, :]       # (1, 1, L): 1.0 on lanes >= hw (hi channel)

        # ---- segmented lane reductions (lo = total - hi) ----
        t1 = jnp.sum(xw, axis=2, keepdims=True)          # (B, rows, 1)
        h1 = jnp.sum(xw * m, axis=2, keepdims=True)
        l1 = t1 - h1
        t2 = jnp.sum(x, axis=2, keepdims=True)
        h2 = jnp.sum(x * m, axis=2, keepdims=True)
        l2 = t2 - h2
        t3 = jnp.sum(xx, axis=2, keepdims=True)
        h3 = jnp.sum(xx * m, axis=2, keepdims=True)
        l3 = t3 - h3

        # ---- lin1 + ReLU gate, per (b, channel) ----
        s_lo = jnp.maximum(l1 + b1, 0.0)                 # channel 2c
        s_hi = jnp.maximum(h1 + b1, 0.0)                 # channel 2c+1

        # ---- BatchNorm2d stats (training mode, biased var), one-pass:
        #      sum(y)   = sum_b s   * sum_hw x
        #      sum(y^2) = sum_b s^2 * sum_hw x^2
        mean_lo = jnp.sum(s_lo * l2, axis=0, keepdims=True) * inv_n
        mean_hi = jnp.sum(s_hi * h2, axis=0, keepdims=True) * inv_n
        eyy_lo = jnp.sum(s_lo * s_lo * l3, axis=0, keepdims=True) * inv_n
        eyy_hi = jnp.sum(s_hi * s_hi * h3, axis=0, keepdims=True) * inv_n
        var_lo = eyy_lo - mean_lo * mean_lo
        var_hi = eyy_hi - mean_hi * mean_hi

        gamma_lo = gb_ref[:, 0:1].reshape(1, rows, 1)
        gamma_hi = gb_ref[:, 1:2].reshape(1, rows, 1)
        beta_lo = gb_ref[:, 2:3].reshape(1, rows, 1)
        beta_hi = gb_ref[:, 3:4].reshape(1, rows, 1)

        a_lo = gamma_lo * jax.lax.rsqrt(var_lo + BN_EPS)
        a_hi = gamma_hi * jax.lax.rsqrt(var_hi + BN_EPS)
        shift_lo = beta_lo - mean_lo * a_lo              # (1, rows, 1)
        shift_hi = beta_hi - mean_hi * a_hi
        scale_lo = s_lo * a_lo                           # (B, rows, 1)
        scale_hi = s_hi * a_hi

        # ---- per-lane blend (mask is exactly 0/1, so this is exact) ----
        scale = scale_lo + (scale_hi - scale_lo) * m     # (B, rows, L)
        shift = shift_lo + (shift_hi - shift_lo) * m
    else:
        # Fallback (no lane folding): straight per-row reductions.
        t1 = jnp.sum(xw, axis=2, keepdims=True)
        t2 = jnp.sum(x, axis=2, keepdims=True)
        t3 = jnp.sum(xx, axis=2, keepdims=True)
        s = jnp.maximum(t1 + b1, 0.0)
        mean = jnp.sum(s * t2, axis=0, keepdims=True) * inv_n
        eyy = jnp.sum(s * s * t3, axis=0, keepdims=True) * inv_n
        var = eyy - mean * mean
        gamma = gb_ref[:, 0:1].reshape(1, rows, 1)
        beta = gb_ref[:, 1:2].reshape(1, rows, 1)
        a = gamma * jax.lax.rsqrt(var + BN_EPS)
        shift = beta - mean * a
        scale = s * a

    # ---- fused output pass: y = s*x never materialized as a tile ----
    o_ref[...] = jnp.maximum(x * scale + shift, 0.0)     # final ReLU


def _pick_grid_steps(c_rows, row_bytes):
    """Pick the channel-axis grid length per TPU generation + VMEM budget."""
    try:
        kind = jax.devices()[0].device_kind.lower()
    except Exception:  # pragma: no cover - defensive
        kind = ""
    want = 1 if "v6" in kind else 2   # v6e: 1 big block; v5e/v7x: 2 steps

    # candidate step counts keeping the sublane (row) dim 8-aligned or full
    cands = [s for s in range(1, c_rows + 1)
             if c_rows % s == 0 and ((c_rows // s) % 8 == 0 or s == 1)]
    # VMEM scaling rule: in+out double-buffered => 4 block buffers must stay
    # well under the 16 MiB (v5e) default scoped limit / v7x 64 MiB physical.
    budget = 12 << 20
    ok = [s for s in cands if (c_rows // s) * row_bytes * 4 <= budget]
    pool = ok if ok else [cands[-1]]
    for s in pool:
        if s >= want:
            return s
    return pool[-1]


def clfe_block(x_nchw, w1, b1, gamma, beta):
    """x_nchw: (B, C, H, W) f32; w1: (1, H*W) torch-style lin1 weight;
    b1: (1,); gamma, beta: (C,).  Returns (B, C, H, W) f32."""
    B, C, H, W = x_nchw.shape
    HW = H * W

    # Channel-pair lane folding: make the lane axis 128-dense when HW < 128.
    fold = 2 if (HW % 128 != 0 and (2 * HW) % 128 == 0 and C % 2 == 0) else 1
    L = fold * HW
    rows = C // fold

    # Free, contiguous reshapes only -- no HBM transpose round-trips.
    xf = jnp.asarray(x_nchw, jnp.float32).reshape(B, rows, L)
    wrow = jnp.asarray(w1, jnp.float32).reshape(HW)
    b1c = jnp.asarray(b1, jnp.float32).reshape(1)
    gamma_f = jnp.asarray(gamma, jnp.float32)
    beta_f = jnp.asarray(beta, jnp.float32)

    if fold == 2:
        w_fold = jnp.concatenate([wrow, wrow]).reshape(1, 1, L)
        mask_hi = jnp.concatenate([jnp.zeros((HW,), jnp.float32),
                                   jnp.ones((HW,), jnp.float32)]).reshape(1, 1, L)
        wm = jnp.concatenate([w_fold, mask_hi], axis=0)          # (2, 1, L)
        g2 = gamma_f.reshape(rows, 2)
        b2 = beta_f.reshape(rows, 2)
        gb = jnp.concatenate([g2, b2], axis=1)                   # (rows, 4)
    else:
        wm = wrow.reshape(1, 1, L)
        gb = jnp.stack([gamma_f, beta_f], axis=1)                # (rows, 2)

    row_bytes = 4 * B * (((L + 127) // 128) * 128)
    steps = _pick_grid_steps(rows, row_bytes)
    tr = rows // steps
    gbw = gb.shape[1]

    # NOTE: the in-kernel BN is valid only because channels alone are tiled:
    # each block holds the full (B, HW) extent of its channels.
    kern = functools.partial(_clfe_kernel, hw=HW, fold=fold)
    # TODO(synk): if the surrounding graph tolerates it, carry x/out in bf16
    # (upcast inside the kernel) to halve HBM traffic on this streaming kernel.
    out = pl.pallas_call(
        kern,
        out_shape=jax.ShapeDtypeStruct((B, rows, L), jnp.float32),
        grid_spec=pltpu.PrefetchScalarGridSpec(
            num_scalar_prefetch=0,
            grid=(steps,),
            in_specs=[
                pl.BlockSpec((B, tr, L), lambda i: (0, i, 0)),
                pl.BlockSpec(wm.shape, lambda i: (0, 0, 0)),
                pl.BlockSpec(memory_space=pltpu.MemorySpace.SMEM),
                pl.BlockSpec((tr, gbw), lambda i: (i, 0)),
            ],
            out_specs=pl.BlockSpec((B, tr, L), lambda i: (0, i, 0)),
        ),
        compiler_params=pltpu.CompilerParams(
            dimension_semantics=("parallel",)),
    )(xf, wm, b1c, gb)

    return out.reshape(B, C, H, W)


def clfe_block_ref(x, w1, b1, gamma, beta):
    """Pure-JAX reference matching the PyTorch forward (training-mode BN)."""
    B, C, H, W = x.shape
    xf = x.reshape(B, C, H * W)
    s = jax.nn.relu(xf @ w1.reshape(1, H * W).T + b1)              # (B, C, 1)
    y = s.reshape(B, C, 1, 1) * x
    mean = jnp.mean(y, axis=(0, 2, 3), keepdims=True)
    var = jnp.mean(jnp.square(y - mean), axis=(0, 2, 3), keepdims=True)
    yn = (y - mean) * jax.lax.rsqrt(var + BN_EPS)
    return jax.nn.relu(gamma.reshape(1, C, 1, 1) * yn + beta.reshape(1, C, 1, 1))


if __name__ == "__main__":
    # BatchNorm2d(512) in the module pins the channel count to 512.
    B, C, H, W = 2, 512, 8, 8
    key = jax.random.PRNGKey(0)
    kx, kw, kb, kg, kbt = jax.random.split(key, 5)

    x = jax.random.normal(kx, (B, C, H, W), dtype=jnp.float32)
    w1 = jax.random.normal(kw, (1, H * W), dtype=jnp.float32) * 0.1   # lin1 weight
    b1 = jax.random.normal(kb, (1,), dtype=jnp.float32) * 0.1         # lin1 bias
    gamma = 1.0 + 0.1 * jax.random.normal(kg, (C,), dtype=jnp.float32)  # BN weight
    beta = 0.1 * jax.random.normal(kbt, (C,), dtype=jnp.float32)        # BN bias

    out = clfe_block(x, w1, b1, gamma, beta)
    out = jax.block_until_ready(out)

    ref = clfe_block_ref(x, w1, b1, gamma, beta)
    assert out.shape == (B, C, H, W)
    assert jnp.allclose(out, ref, rtol=1e-4, atol=1e-4), "mismatch vs reference"

    print("KERNEL_OK")
</pallas_src>

<mosaic_0001>
module attributes {stable_mosaic.version = 11 : i64} {
  func.func @_clfe_kernel(%arg0: i32, %arg1: memref<2x128x128xf32, #tpu.memory_space<vmem>>, %arg2: memref<2x1x128xf32, #tpu.memory_space<vmem>>, %arg3: memref<1xf32, #tpu.memory_space<smem>>, %arg4: memref<128x4xf32, #tpu.memory_space<vmem>>, %arg5: memref<2x128x128xf32, #tpu.memory_space<vmem>>) attributes {dimension_semantics = [#tpu.dimension_semantics<parallel>], iteration_bounds = array<i64: 2>, scalar_prefetch = 0 : i64, scratch_operands = 0 : i64, tpu.core_type = #tpu.core_type<tc>, window_params = [{transform_indices = @transform_0, window_bounds = array<i64: 2, 128, 128>}, {pipeline_mode = #tpu.pipeline_mode<synchronous>, transform_indices = @transform_1, window_bounds = array<i64: 2, 1, 128>}, {transform_indices = @transform_2, window_bounds = array<i64: 1>}, {transform_indices = @transform_3, window_bounds = array<i64: 128, 4>}, {transform_indices = @transform_4, window_bounds = array<i64: 2, 128, 128>}]} {
    %c0 = arith.constant 0 : index
    %c0_0 = arith.constant 0 : index
    %c0_1 = arith.constant 0 : index
    %0 = vector.load %arg1[%c0, %c0_0, %c0_1] : memref<2x128x128xf32, #tpu.memory_space<vmem>>, vector<2x128x128xf32>
    %c0_2 = arith.constant 0 : index
    %1 = memref.load %arg3[%c0_2] : memref<1xf32, #tpu.memory_space<smem>>
    %c0_3 = arith.constant 0 : index
    %c0_4 = arith.constant 0 : index
    %c0_5 = arith.constant 0 : index
    %2 = vector.load %arg2[%c0_3, %c0_4, %c0_5] : memref<2x1x128xf32, #tpu.memory_space<vmem>>, vector<1x1x128xf32>
    %3 = vector.broadcast %2 : vector<1x1x128xf32> to vector<2x128x128xf32>
    %4 = arith.mulf %0, %3 : vector<2x128x128xf32>
    %5 = arith.mulf %0, %0 : vector<2x128x128xf32>
    %c1 = arith.constant 1 : index
    %c0_6 = arith.constant 0 : index
    %c0_7 = arith.constant 0 : index
    %6 = vector.load %arg2[%c1, %c0_6, %c0_7] : memref<2x1x128xf32, #tpu.memory_space<vmem>>, vector<1x1x128xf32>
    %cst = arith.constant dense<0.000000e+00> : vector<2x128xf32>
    %7 = vector.multi_reduction <add>, %4, %cst [2] : vector<2x128x128xf32> to vector<2x128xf32>
    %8 = vector.shape_cast %7 : vector<2x128xf32> to vector<2x128x1xf32>
    %9 = vector.broadcast %6 : vector<1x1x128xf32> to vector<2x128x128xf32>
    %10 = arith.mulf %4, %9 : vector<2x128x128xf32>
    %cst_8 = arith.constant dense<0.000000e+00> : vector<2x128xf32>
    %11 = vector.multi_reduction <add>, %10, %cst_8 [2] : vector<2x128x128xf32> to vector<2x128xf32>
    %12 = vector.shape_cast %11 : vector<2x128xf32> to vector<2x128x1xf32>
    %13 = arith.subf %8, %12 : vector<2x128x1xf32>
    %cst_9 = arith.constant dense<0.000000e+00> : vector<2x128xf32>
    %14 = vector.multi_reduction <add>, %0, %cst_9 [2] : vector<2x128x128xf32> to vector<2x128xf32>
    %15 = vector.shape_cast %14 : vector<2x128xf32> to vector<2x128x1xf32>
    %16 = vector.broadcast %6 : vector<1x1x128xf32> to vector<2x128x128xf32>
    %17 = arith.mulf %0, %16 : vector<2x128x128xf32>
    %cst_10 = arith.constant dense<0.000000e+00> : vector<2x128xf32>
    %18 = vector.multi_reduction <add>, %17, %cst_10 [2] : vector<2x128x128xf32> to vector<2x128xf32>
    %19 = vector.shape_cast %18 : vector<2x128xf32> to vector<2x128x1xf32>
    %20 = arith.subf %15, %19 : vector<2x128x1xf32>
    %cst_11 = arith.constant dense<0.000000e+00> : vector<2x128xf32>
    %21 = vector.multi_reduction <add>, %5, %cst_11 [2] : vector<2x128x128xf32> to vector<2x128xf32>
    %22 = vector.shape_cast %21 : vector<2x128xf32> to vector<2x128x1xf32>
    %23 = vector.broadcast %6 : vector<1x1x128xf32> to vector<2x128x128xf32>
    %24 = arith.mulf %5, %23 : vector<2x128x128xf32>
    %cst_12 = arith.constant dense<0.000000e+00> : vector<2x128xf32>
    %25 = vector.multi_reduction <add>, %24, %cst_12 [2] : vector<2x128x128xf32> to vector<2x128xf32>
    %26 = vector.shape_cast %25 : vector<2x128xf32> to vector<2x128x1xf32>
    %27 = arith.subf %22, %26 : vector<2x128x1xf32>
    %28 = vector.broadcast %1 : f32 to vector<2x128x1xf32>
    %29 = arith.addf %13, %28 : vector<2x128x1xf32>
    %cst_13 = arith.constant 0.000000e+00 : f32
    %30 = vector.broadcast %cst_13 : f32 to vector<2x128x1xf32>
    %31 = arith.maximumf %29, %30 : vector<2x128x1xf32>
    %32 = vector.broadcast %1 : f32 to vector<2x128x1xf32>
    %33 = arith.addf %12, %32 : vector<2x128x1xf32>
    %cst_14 = arith.constant 0.000000e+00 : f32
    %34 = vector.broadcast %cst_14 : f32 to vector<2x128x1xf32>
    %35 = arith.maximumf %33, %34 : vector<2x128x1xf32>
    %36 = arith.mulf %31, %20 : vector<2x128x1xf32>
    %cst_15 = arith.constant dense<0.000000e+00> : vector<128x1xf32>
    %37 = vector.multi_reduction <add>, %36, %cst_15 [0] : vector<2x128x1xf32> to vector<128x1xf32>
    %38 = vector.shape_cast %37 : vector<128x1xf32> to vector<1x128x1xf32>
    %cst_16 = arith.constant 7.812500e-03 : f32
    %39 = vector.broadcast %cst_16 : f32 to vector<1x128x1xf32>
    %40 = arith.mulf %38, %39 : vector<1x128x1xf32>
    %41 = arith.mulf %35, %19 : vector<2x128x1xf32>
    %cst_17 = arith.constant dense<0.000000e+00> : vector<128x1xf32>
    %42 = vector.multi_reduction <add>, %41, %cst_17 [0] : vector<2x128x1xf32> to vector<128x1xf32>
    %43 = vector.shape_cast %42 : vector<128x1xf32> to vector<1x128x1xf32>
    %cst_18 = arith.constant 7.812500e-03 : f32
    %44 = vector.broadcast %cst_18 : f32 to vector<1x128x1xf32>
    %45 = arith.mulf %43, %44 : vector<1x128x1xf32>
    %46 = arith.mulf %31, %31 : vector<2x128x1xf32>
    %47 = arith.mulf %46, %27 : vector<2x128x1xf32>
    %cst_19 = arith.constant dense<0.000000e+00> : vector<128x1xf32>
    %48 = vector.multi_reduction <add>, %47, %cst_19 [0] : vector<2x128x1xf32> to vector<128x1xf32>
    %49 = vector.shape_cast %48 : vector<128x1xf32> to vector<1x128x1xf32>
    %cst_20 = arith.constant 7.812500e-03 : f32
    %50 = vector.broadcast %cst_20 : f32 to vector<1x128x1xf32>
    %51 = arith.mulf %49, %50 : vector<1x128x1xf32>
    %52 = arith.mulf %35, %35 : vector<2x128x1xf32>
    %53 = arith.mulf %52, %26 : vector<2x128x1xf32>
    %cst_21 = arith.constant dense<0.000000e+00> : vector<128x1xf32>
    %54 = vector.multi_reduction <add>, %53, %cst_21 [0] : vector<2x128x1xf32> to vector<128x1xf32>
    %55 = vector.shape_cast %54 : vector<128x1xf32> to vector<1x128x1xf32>
    %cst_22 = arith.constant 7.812500e-03 : f32
    %56 = vector.broadcast %cst_22 : f32 to vector<1x128x1xf32>
    %57 = arith.mulf %55, %56 : vector<1x128x1xf32>
    %58 = arith.mulf %40, %40 : vector<1x128x1xf32>
    %59 = arith.subf %51, %58 : vector<1x128x1xf32>
    %60 = arith.mulf %45, %45 : vector<1x128x1xf32>
    %61 = arith.subf %57, %60 : vector<1x128x1xf32>
    %c0_23 = arith.constant 0 : index
    %c0_24 = arith.constant 0 : index
    %62 = vector.load %arg4[%c0_23, %c0_24] : memref<128x4xf32, #tpu.memory_space<vmem>>, vector<128x1xf32>
    %63 = vector.shape_cast %62 : vector<128x1xf32> to vector<1x128x1xf32>
    %c0_25 = arith.constant 0 : index
    %c1_26 = arith.constant 1 : index
    %64 = vector.load %arg4[%c0_25, %c1_26] : memref<128x4xf32, #tpu.memory_space<vmem>>, vector<128x1xf32>
    %65 = vector.shape_cast %64 : vector<128x1xf32> to vector<1x128x1xf32>
    %c0_27 = arith.constant 0 : index
    %c2 = arith.constant 2 : index
    %66 = vector.load %arg4[%c0_27, %c2] : memref<128x4xf32, #tpu.memory_space<vmem>>, vector<128x1xf32>
    %67 = vector.shape_cast %66 : vector<128x1xf32> to vector<1x128x1xf32>
    %c0_28 = arith.constant 0 : index
    %c3 = arith.constant 3 : index
    %68 = vector.load %arg4[%c0_28, %c3] : memref<128x4xf32, #tpu.memory_space<vmem>>, vector<128x1xf32>
    %69 = vector.shape_cast %68 : vector<128x1xf32> to vector<1x128x1xf32>
    %cst_29 = arith.constant 9.99999974E-6 : f32
    %70 = vector.broadcast %cst_29 : f32 to vector<1x128x1xf32>
    %71 = arith.addf %59, %70 : vector<1x128x1xf32>
    %72 = math.rsqrt %71 : vector<1x128x1xf32>
    %73 = arith.mulf %63, %72 : vector<1x128x1xf32>
    %cst_30 = arith.constant 9.99999974E-6 : f32
    %74 = vector.broadcast %cst_30 : f32 to vector<1x128x1xf32>
    %75 = arith.addf %61, %74 : vector<1x128x1xf32>
    %76 = math.rsqrt %75 : vector<1x128x1xf32>
    %77 = arith.mulf %65, %76 : vector<1x128x1xf32>
    %78 = arith.mulf %40, %73 : vector<1x128x1xf32>
    %79 = arith.subf %67, %78 : vector<1x128x1xf32>
    %80 = arith.mulf %45, %77 : vector<1x128x1xf32>
    %81 = arith.subf %69, %80 : vector<1x128x1xf32>
    %82 = vector.broadcast %73 : vector<1x128x1xf32> to vector<2x128x1xf32>
    %83 = arith.mulf %31, %82 : vector<2x128x1xf32>
    %84 = vector.broadcast %77 : vector<1x128x1xf32> to vector<2x128x1xf32>
    %85 = arith.mulf %35, %84 : vector<2x128x1xf32>
    %86 = arith.subf %85, %83 : vector<2x128x1xf32>
    %87 = vector.broadcast %86 : vector<2x128x1xf32> to vector<2x128x128xf32>
    %88 = vector.broadcast %6 : vector<1x1x128xf32> to vector<2x128x128xf32>
    %89 = arith.mulf %87, %88 : vector<2x128x128xf32>
    %90 = vector.broadcast %83 : vector<2x128x1xf32> to vector<2x128x128xf32>
    %91 = arith.addf %90, %89 : vector<2x128x128xf32>
    %92 = arith.subf %81, %79 : vector<1x128x1xf32>
    %93 = vector.broadcast %92 : vector<1x128x1xf32> to vector<1x128x128xf32>
    %94 = vector.broadcast %6 : vector<1x1x128xf32> to vector<1x128x128xf32>
    %95 = arith.mulf %93, %94 : vector<1x128x128xf32>
    %96 = vector.broadcast %79 : vector<1x128x1xf32> to vector<1x128x128xf32>
    %97 = arith.addf %96, %95 : vector<1x128x128xf32>
    %98 = arith.mulf %0, %91 : vector<2x128x128xf32>
    %99 = vector.broadcast %97 : vector<1x128x128xf32> to vector<2x128x128xf32>
    %100 = arith.addf %98, %99 : vector<2x128x128xf32>
    %cst_31 = arith.constant 0.000000e+00 : f32
    %101 = vector.broadcast %cst_31 : f32 to vector<2x128x128xf32>
    %102 = arith.maximumf %100, %101 : vector<2x128x128xf32>
    %c0_32 = arith.constant 0 : index
    %c0_33 = arith.constant 0 : index
    %c0_34 = arith.constant 0 : index
    %103 = vector.load %arg5[%c0_32, %c0_33, %c0_34] : memref<2x128x128xf32, #tpu.memory_space<vmem>>, vector<2x128x128xf32>
    tpu.vector_store %arg5[%c0_32, %c0_33, %c0_34], %102 {strides = array<i32>} : memref<2x128x128xf32, #tpu.memory_space<vmem>>, vector<2x128x128xf32>,
    return
  }
  func.func @transform_0(%arg0: i32) -> (i32, i32, i32) {
    %c0_i32 = arith.constant 0 : i32
    %c0_i32_0 = arith.constant 0 : i32
    %c0_i32_1 = arith.constant 0 : i32
    return %c0_i32, %arg0, %c0_i32_0 : i32, i32, i32
  }
  func.func @transform_1(%arg0: i32) -> (i32, i32, i32) {
    %c0_i32 = arith.constant 0 : i32
    %c0_i32_0 = arith.constant 0 : i32
    %c0_i32_1 = arith.constant 0 : i32
    %c0_i32_2 = arith.constant 0 : i32
    return %c0_i32, %c0_i32_0, %c0_i32_1 : i32, i32, i32
  }
  func.func @transform_2(%arg0: i32) -> i32 {
    %c0_i32 = arith.constant 0 : i32
    %c0_i32_0 = arith.constant 0 : i32
    return %c0_i32 : i32
  }
  func.func @transform_3(%arg0: i32) -> (i32, i32) {
    %c0_i32 = arith.constant 0 : i32
    %c0_i32_0 = arith.constant 0 : i32
    return %arg0, %c0_i32 : i32, i32
  }
  func.func @transform_4(%arg0: i32) -> (i32, i32, i32) {
    %c0_i32 = arith.constant 0 : i32
    %c0_i32_0 = arith.constant 0 : i32
    %c0_i32_1 = arith.constant 0 : i32
    return %c0_i32, %arg0, %c0_i32_0 : i32, i32, i32
  }
}

</mosaic_0001>

<llo_original>
// kernel: tpu_custom_call.1
$region0: #{tpu_custom_call.1}
  #allocation0 [shape = 'u32[]', space=smem, size = 0x4, offset = 0x4, fixed_abs, tag = 'smem constant byte address 0x4 - core index']
  #allocation1 [shape = 'u32[144,128]{1,0:T(1,128)}', space=vmem, size = 0x12000, scoped, tag = 'internal scratch']
  #allocation2 [shape = 'f32[1]{0:T(128)S(6)}', space=smem, size = 0x200, scoped, tag = 'scoped memory for tpu_custom_call.1']
  #allocation7 [shape = 's32[]', space=sflag, size = 0x4, offset = 0, fixed_abs, tag = 'sflag constant byte address 0x0 - dummy sync flag']
  #allocation9 [shape = 's32[]', space=sflag, size = 0x4, offset = 0, fixed_abs, tag = 'sflag constant byte address 0x0 - dummy sync flag']
  %s0 = inlined_call_operand.hbm [shape: f32[2,256,128], index: 0, kind: input, shape index: {}]
  %s1 = inlined_call_operand.vmem [shape: f32[2,1,128], index: 1, kind: input, shape index: {}]
  %s2 = inlined_call_operand.<no memory space> [shape: f32[1], index: 2, kind: input, shape index: {}]
  %s3 = inlined_call_operand.vmem [shape: f32[256,4], index: 3, kind: input, shape index: {}]
  %s4 = inlined_call_operand.hbm [shape: f32[2,256,128], index: 4, kind: output, shape index: {}]
  %s5 = sld [smem:[#allocation0]]
  $region53: #{tpu_custom_call.1} parent=0
    _
  %s7 = ssub.s32 1, %s5
  %s8 = scalar_select 0, %s7, %s5
  %9 = sst [smem:[#allocation2]] %s2
  $region1: #{tpu_custom_call.1} parent=0
    #allocation3 [shape = 'u8[262144]{0}', space=vmem, size = 0x40000, scoped, tag = 'input window, operand 0']
    #allocation4 [shape = 's32[2]{0}', space=sflag, size = 0x8, scoped, tag = 'scoped memory for tpu_custom_call.1']
    #allocation5 [shape = 's32[2]{0}', space=sflag, size = 0x8, scoped, tag = 'scoped memory for tpu_custom_call.1']
    #allocation6 [shape = 'u8[262144]{0}', space=vmem, size = 0x40000, scoped, tag = 'output window, operand 0']
    %10 = vsyncpa [#allocation4], 0
    %s11 = scalar_lea.sflag [#allocation4], 1
    %12 = vsyncpa %s11, 0
    %13 = vsyncpa [#allocation5], 0
    %s14 = scalar_lea.sflag [#allocation5], 1
    %15 = vsyncpa %s14, 0
    loop: start=0, step=1, limit=4
    $region2: #{tpu_custom_call.1} parent=1 // loop_pre_header
      _
    $region3: #{tpu_custom_call.1} parent=1 // loop_header
      %s17 = sphi 0, %s21
      %p18 = scmp.ge.s32.totalorder %s17, 4
      %s27 = sphi 0, %s29
      %s30 = sphi 0, %s27
      %s31 = sphi 0, %s30
      %s47 = sphi 0, %s31
      %s51 = sphi 0, %s51
      %s53 = sphi 0, %s51
      %s54 = sphi 0, %s53
      %s68 = sphi 0, %s54
      %s72 = sphi 0, %s72
      %s74 = sphi 0, %s72
      %s75 = sphi 0, %s74
      %s89 = sphi 0, %s75
      %s95 = sphi 0, %s97
      %s98 = sphi 0, %s95
      %s99 = sphi 0, %s98
      %s115 = sphi 0, %s99
      %s121 = sphi 0, %s123
      %s124 = sphi 0, %s121
      %s125 = sphi 0, %s124
      %s141 = sphi 0, %s125
    $region4: #{tpu_custom_call.1} parent=1 // loop_header_branch
      %20 = sbr.rel (%p18) target = $region8
    $region5: #{tpu_custom_call.1} parent=1 // loop_body
      %s22 = ssub.s32 %s17, 1
      %s23 = ssub.s32 %s17, 2
      %s24 = sadd.s32 %s17, 1
      %s25 = ssub.s32 %s17, %s24
      %p26 = scmp.eq.s32.totalorder %s25, 0
      %s28 = sadd.s32 %s27, 1
      %s29 = scalar_select %p26, %s27, %s28
      %p32 = pneg %p26
      %p33 = scmp.eq.s32.totalorder %s17, 1
      %p34 = por %p32, %p33
      %p35 = scmp.ne.s32.totalorder %s27, %s30
      %p36 = scmp.eq.s32.totalorder %s17, 0
      %p37 = por %p35, %p36
      %p38 = scmp.ne.s32.totalorder %s27, %s30
      %p39 = scmp.eq.s32.totalorder %s22, 1
      %p40 = por %p38, %p39
      %p41 = scmp.ne.s32.totalorder %s30, %s31
      %p42 = scmp.eq.s32.totalorder %s22, 0
      %p43 = por %p41, %p42
      %p44 = scmp.ne.s32.totalorder %s30, %s31
      %p45 = scmp.eq.s32.totalorder %s23, 1
      %p46 = por %p44, %p45
      %p48 = scmp.ne.s32.totalorder %s31, %s47
      %p49 = scmp.eq.s32.totalorder %s23, 0
      %p50 = por %p48, %p49
      %s52 = sadd.s32 %s51, 1
      %p55 = scmp.eq.s32.totalorder %s17, 1
      %p56 = scmp.ne.s32.totalorder %s51, %s53
      %p57 = scmp.eq.s32.totalorder %s17, 0
      %p58 = por %p56, %p57
      %p59 = scmp.ne.s32.totalorder %s51, %s53
      %p60 = scmp.eq.s32.totalorder %s22, 1
      %p61 = por %p59, %p60
      %p62 = scmp.ne.s32.totalorder %s53, %s54
      %p63 = scmp.eq.s32.totalorder %s22, 0
      %p64 = por %p62, %p63
      %p65 = scmp.ne.s32.totalorder %s53, %s54
      %p66 = scmp.eq.s32.totalorder %s23, 1
      %p67 = por %p65, %p66
      %p69 = scmp.ne.s32.totalorder %s54, %s68
      %p70 = scmp.eq.s32.totalorder %s23, 0
      %p71 = por %p69, %p70
      %s73 = sadd.s32 %s72, 1
      %p76 = scmp.eq.s32.totalorder %s17, 1
      %p77 = scmp.ne.s32.totalorder %s72, %s74
      %p78 = scmp.eq.s32.totalorder %s17, 0
      %p79 = por %p77, %p78
      %p80 = scmp.ne.s32.totalorder %s72, %s74
      %p81 = scmp.eq.s32.totalorder %s22, 1
      %p82 = por %p80, %p81
      %p83 = scmp.ne.s32.totalorder %s74, %s75
      %p84 = scmp.eq.s32.totalorder %s22, 0
      %p85 = por %p83, %p84
      %p86 = scmp.ne.s32.totalorder %s74, %s75
      %p87 = scmp.eq.s32.totalorder %s23, 1
      %p88 = por %p86, %p87
      %p90 = scmp.ne.s32.totalorder %s75, %s89
      %p91 = scmp.eq.s32.totalorder %s23, 0
      %p92 = por %p90, %p91
      %s93 = ssub.s32 %s17, %s24
      %p94 = scmp.eq.s32.totalorder %s93, 0
      %s96 = sadd.s32 %s95, 1
      %s97 = scalar_select %p94, %s95, %s96
      %p100 = pneg %p94
      %p101 = scmp.eq.s32.totalorder %s17, 1
      %p102 = por %p100, %p101
      %p103 = scmp.ne.s32.totalorder %s95, %s98
      %p104 = scmp.eq.s32.totalorder %s17, 0
      %p105 = por %p103, %p104
      %p106 = scmp.ne.s32.totalorder %s95, %s98
      %p107 = scmp.eq.s32.totalorder %s22, 1
      %p108 = por %p106, %p107
      %p109 = scmp.ne.s32.totalorder %s98, %s99
      %p110 = scmp.eq.s32.totalorder %s22, 0
      %p111 = por %p109, %p110
      %p112 = scmp.ne.s32.totalorder %s98, %s99
      %p113 = scmp.eq.s32.totalorder %s23, 1
      %p114 = por %p112, %p113
      %p116 = scmp.ne.s32.totalorder %s99, %s115
      %p117 = scmp.eq.s32.totalorder %s23, 0
      %p118 = por %p116, %p117
      %s119 = ssub.s32 %s17, %s24
      %p120 = scmp.eq.s32.totalorder %s119, 0
      %s122 = sadd.s32 %s121, 1
      %s123 = scalar_select %p120, %s121, %s122
      %p126 = pneg %p120
      %p127 = scmp.eq.s32.totalorder %s17, 1
      %p128 = por %p126, %p127
      %p129 = scmp.ne.s32.totalorder %s121, %s124
      %p130 = scmp.eq.s32.totalorder %s17, 0
      %p131 = por %p129, %p130
      %p132 = scmp.ne.s32.totalorder %s121, %s124
      %p133 = scmp.eq.s32.totalorder %s22, 1
      %p134 = por %p132, %p133
      %p135 = scmp.ne.s32.totalorder %s124, %s125
      %p136 = scmp.eq.s32.totalorder %s22, 0
      %p137 = por %p135, %p136
      %p138 = scmp.ne.s32.totalorder %s124, %s125
      %p139 = scmp.eq.s32.totalorder %s23, 1
      %p140 = por %p138, %p139
      %p142 = scmp.ne.s32.totalorder %s125, %s141
      %p143 = scmp.eq.s32.totalorder %s23, 0
      %p144 = por %p142, %p143
      %p145 = scmp.le.s32.totalorder 1, %s17
      %p146 = scmp.lt.s32.totalorder %s17, 3
      %p147 = pnand %p145, %p146
      %p148 = pneg %p147
      // Predicated region
      $region9: #{tpu_custom_call.1} parent=5 // pred_check
        _
      $region10: #{tpu_custom_call.1} parent=5 // pred_check_branch
        %150 = sbr.rel (%p147) target = $region12
      $region11: #{tpu_custom_call.1} parent=5 // pred_region
        %s151 = ssub.s32 %s17, 1
        // Predicated region
        $region13: #{tpu_custom_call.1} parent=11 // pred_check
          %p152 = pneg %p64
        $region14: #{tpu_custom_call.1} parent=11 // pred_check_branch
          %154 = sbr.rel (%p152) target = $region16
        $region15: #{tpu_custom_call.1} parent=11 // pred_region
          _
        $region16: #{tpu_custom_call.1} parent=11 // pred_fallthru
          _
        // Predicated region
        $region17: #{tpu_custom_call.1} parent=11 // pred_check
          %p155 = pneg %p85
        $region18: #{tpu_custom_call.1} parent=11 // pred_check_branch
          %157 = sbr.rel (%p155) target = $region20
        $region19: #{tpu_custom_call.1} parent=11 // pred_region
          _
        $region20: #{tpu_custom_call.1} parent=11 // pred_fallthru
          _
      $region12: #{tpu_custom_call.1} parent=5 // pred_fallthru
        _
      %p158 = scmp.lt.s32.totalorder %s17, 2
      // Predicated region
      $region21: #{tpu_custom_call.1} parent=5 // pred_check
        %p159 = pneg %p158
      $region22: #{tpu_custom_call.1} parent=5 // pred_check_branch
        %161 = sbr.rel (%p159) target = $region24
      $region23: #{tpu_custom_call.1} parent=5 // pred_region
        // Predicated region
        $region25: #{tpu_custom_call.1} parent=23 // pred_check
          %p162 = pneg %p37
        $region26: #{tpu_custom_call.1} parent=23 // pred_check_branch
          %164 = sbr.rel (%p162) target = $region28
        $region27: #{tpu_custom_call.1} parent=23 // pred_region
          #allocation8 [shape = 'u32[6]{0}', space=smem, size = 0x18, scoped, tag = 'DMA stride descriptor']
          %s165 = sand.u32 %s27, 1
          %s166 = scalar_lea.sflag [#allocation4], %s165
          %s167 = sand.u32 %s27, 1
          %s168 = smul.addr %s167, 256
          %s169 = scalar_lea.vmem [#allocation3], %s168
          %s170 = smul.u32 16, %s17
          %s172 = ssub.s32 4096, 4096
          %173 = vsyncadd %s166, %s172
          %s174 = smul.addr %s170, 128
          %s175 = scalar_lea.hbm %s0, %s174
          %s177 = sshll.u32 1, 14
          %s178 = sxor.u32 4294967295, %s177
          %s180 = sld [smem:[#allocation0]]
          %s181 = sadd.s32 2, %s180
          %s183 = sshll.u32 7, 26
          %s184 = sxor.u32 4294967295, %s183
          %s185 = sand.u32 0, %s184
          %s186 = sshll.u32 %s181, 26
          %s187 = sor.u32 %s185, %s186
          %s188 = sshll.u32 %s169, 4
          %s189 = int_to_ptr.vmem [resolvable:$true] %s188
          %195 = sst [smem:[#allocation8]] 4096
          %s196 = scalar_lea.smem [#allocation8], 1
          %197 = sst [smem:[%s196]] 2048
          %s198 = scalar_lea.smem [#allocation8], 2
          %199 = sst [smem:[%s198]] 16
          %s200 = scalar_lea.smem [#allocation8], 3
          %201 = sst [smem:[%s200]] 128
          %s202 = scalar_lea.smem [#allocation8], 4
          %203 = sst [smem:[%s202]] 128
          %s204 = scalar_lea.smem [#allocation8], 5
          %205 = sst [smem:[%s204]] 8
          %207 = dma.general %s175, 4096, %s189, %s166, 131072, [#allocation8], %s187, 0
        $region28: #{tpu_custom_call.1} parent=23 // pred_fallthru
          _
        // Predicated region
        $region29: #{tpu_custom_call.1} parent=23 // pred_check
          %p208 = pneg %p105
        $region30: #{tpu_custom_call.1} parent=23 // pred_check_branch
          %210 = sbr.rel (%p208) target = $region32
        $region31: #{tpu_custom_call.1} parent=23 // pred_region
          %s211 = smul.u32 16, %s17
          %p212 = scmp.lt.s32.totalorder %s211, 31
          %s213 = scalar_select %p212, %s211, 31
          %s214 = smul.addr %s213, 8
          %s215 = scalar_lea.vmem %s3, %s214
          %s216 = smul.u32 16, %s17
        $region32: #{tpu_custom_call.1} parent=23 // pred_fallthru
          _
      $region24: #{tpu_custom_call.1} parent=5 // pred_fallthru
        _
      %p217 = scmp.le.s32.totalorder 1, %s17
      %p218 = scmp.lt.s32.totalorder %s17, 3
      %p219 = pnand %p217, %p218
      %p220 = pneg %p219
      // Predicated region
      $region33: #{tpu_custom_call.1} parent=5 // pred_check
        _
      $region34: #{tpu_custom_call.1} parent=5 // pred_check_branch
        %222 = sbr.rel (%p219) target = $region36
      $region35: #{tpu_custom_call.1} parent=5 // pred_region
        %s223 = ssub.s32 %s17, 1
        %s224 = sand.u32 %s30, 1
        %s225 = scalar_lea.sflag [#allocation4], %s224
        %s226 = sand.u32 %s30, 1
        %s227 = smul.addr %s226, 256
        %s228 = scalar_lea.vmem [#allocation3], %s227
        // Predicated region
        $region37: #{tpu_custom_call.1} parent=35 // pred_check
          %p229 = pneg %p43
        $region38: #{tpu_custom_call.1} parent=35 // pred_check_branch
          %231 = sbr.rel (%p229) target = $region40
        $region39: #{tpu_custom_call.1} parent=35 // pred_region
          %232 = dma.done %s225, 4096
        $region40: #{tpu_custom_call.1} parent=35 // pred_fallthru
          _
        %s233 = sand.u32 %s30, 1
        %s234 = scalar_lea.sflag [#allocation4], %s233
        %s235 = sand.u32 %s30, 1
        %s236 = smul.addr %s235, 256
        %s237 = scalar_lea.vmem [#allocation3], %s236
        %p238 = pneg %p43
        %p239 = pneg %p40
        %p240 = pneg %p64
        %p241 = pneg %p61
        %p242 = pneg %p85
        %p243 = pneg %p82
        %s244 = smul.u32 16, %s22
        %p245 = scmp.lt.s32.totalorder %s244, 31
        %s246 = scalar_select %p245, %s244, 31
        %s247 = smul.addr %s246, 8
        %s248 = scalar_lea.vmem %s3, %s247
        %p249 = pneg %p111
        %p250 = pneg %p108
        %p251 = pneg %p137
        %p252 = pneg %p134
        %s253 = sand.u32 %s124, 1
        %s254 = scalar_lea.sflag [#allocation5], %s253
        %s255 = sand.u32 %s124, 1
        %s256 = smul.addr %s255, 256
        %s257 = scalar_lea.vmem [#allocation6], %s256
        %s258 = smul.u32 16, %s22
        %s259 = smul.u32 16, %s22
        %p260 = scmp.lt.s32.totalorder %s259, 31
        %s261 = scalar_select %p260, %s259, 31
        %s262 = smul.addr %s261, 8
        %s263 = scalar_lea.vmem %s3, %s262
        %s264 = smul.u32 16, %s22
        %s265 = smul.u32 16, %s22
        %v266 = vld [vmem:[%s228] sm:$0xff]
        %v267 = vld [vmem:[%s228 + $0x8] sm:$0xff]
        %v268 = vld [vmem:[%s228 + $0x10] sm:$0xff]
        %v269 = vld [vmem:[%s228 + $0x18] sm:$0xff]
        %v270 = vld [vmem:[%s228 + $0x20] sm:$0xff]
        %v271 = vld [vmem:[%s228 + $0x28] sm:$0xff]
        %v272 = vld [vmem:[%s228 + $0x30] sm:$0xff]
        %v273 = vld [vmem:[%s228 + $0x38] sm:$0xff]
        %v274 = vld [vmem:[%s228 + $0x40] sm:$0xff]
        %v275 = vld [vmem:[%s228 + $0x48] sm:$0xff]
        %v276 = vld [vmem:[%s228 + $0x50] sm:$0xff]
        %v277 = vld [vmem:[%s228 + $0x58] sm:$0xff]
        %v278 = vld [vmem:[%s228 + $0x60] sm:$0xff]
        %v279 = vld [vmem:[%s228 + $0x68] sm:$0xff]
        %v280 = vld [vmem:[%s228 + $0x70] sm:$0xff]
        %v281 = vld [vmem:[%s228 + $0x78] sm:$0xff]
        %v282 = vld [vmem:[%s228 + $0x80] sm:$0xff]
        %v283 = vld [vmem:[%s228 + $0x88] sm:$0xff]
        %v284 = vld [vmem:[%s228 + $0x90] sm:$0xff]
        %v285 = vld [vmem:[%s228 + $0x98] sm:$0xff]
        %v286 = vld [vmem:[%s228 + $0xa0] sm:$0xff]
        %v287 = vld [vmem:[%s228 + $0xa8] sm:$0xff]
        %v288 = vld [vmem:[%s228 + $0xb0] sm:$0xff]
        %v289 = vld [vmem:[%s228 + $0xb8] sm:$0xff]
        %v290 = vld [vmem:[%s228 + $0xc0] sm:$0xff]
        %v291 = vld [vmem:[%s228 + $0xc8] sm:$0xff]
        %v292 = vld [vmem:[%s228 + $0xd0] sm:$0xff]
        %v293 = vld [vmem:[%s228 + $0xd8] sm:$0xff]
        %v294 = vld [vmem:[%s228 + $0xe0] sm:$0xff]
        %v295 = vld [vmem:[%s228 + $0xe8] sm:$0xff]
        %v296 = vld [vmem:[%s228 + $0xf0] sm:$0xff]
        %v297 = vld [vmem:[%s228 + $0xf8] sm:$0xff]
        %s298 = sld [smem:[#allocation2]]
        %v299 = vld [vmem:[%s1] sm:$0x1]
        %v301 = vlaneseq
        %v302 = vshrl.u32 %v301, 7
        %v303 = vsub.s32 0, %v302
        %v304 = vrot.slane %v299, %v303
        %v306 = vmul.f32 %v266, %v304
        %v307 = vmul.f32 %v267, %v304
        %v308 = vmul.f32 %v268, %v304
        %v309 = vmul.f32 %v269, %v304
        %v310 = vmul.f32 %v270, %v304
        %v311 = vmul.f32 %v271, %v304
        %v312 = vmul.f32 %v272, %v304
        %v313 = vmul.f32 %v273, %v304
        %v314 = vmul.f32 %v274, %v304
        %v315 = vmul.f32 %v275, %v304
        %v316 = vmul.f32 %v276, %v304
        %v317 = vmul.f32 %v277, %v304
        %v318 = vmul.f32 %v278, %v304
        %v319 = vmul.f32 %v279, %v304
        %v320 = vmul.f32 %v280, %v304
        %v321 = vmul.f32 %v281, %v304
        %v322 = vmul.f32 %v282, %v304
        %v323 = vmul.f32 %v283, %v304
        %v324 = vmul.f32 %v284, %v304
        %v325 = vmul.f32 %v285, %v304
        %v326 = vmul.f32 %v286, %v304
        %v327 = vmul.f32 %v287, %v304
        %v328 = vmul.f32 %v288, %v304
        %v329 = vmul.f32 %v289, %v304
        %v330 = vmul.f32 %v290, %v304
        %v331 = vmul.f32 %v291, %v304
        %v332 = vmul.f32 %v292, %v304
        %v333 = vmul.f32 %v293, %v304
        %v334 = vmul.f32 %v294, %v304
        %v335 = vmul.f32 %v295, %v304
        %v336 = vmul.f32 %v296, %v304
        %v337 = vmul.f32 %v297, %v304
        %v338 = vmul.f32 %v266, %v266
        %v339 = vmul.f32 %v267, %v267
        %v340 = vmul.f32 %v268, %v268
        %v341 = vmul.f32 %v269, %v269
        %v342 = vmul.f32 %v270, %v270
        %v343 = vmul.f32 %v271, %v271
        %v344 = vmul.f32 %v272, %v272
        %v345 = vmul.f32 %v273, %v273
        %v346 = vmul.f32 %v274, %v274
        %v347 = vmul.f32 %v275, %v275
        %v348 = vmul.f32 %v276, %v276
        %v349 = vmul.f32 %v277, %v277
        %v350 = vmul.f32 %v278, %v278
        %v351 = vmul.f32 %v279, %v279
        %v352 = vmul.f32 %v280, %v280
        %v353 = vmul.f32 %v281, %v281
        %v354 = vmul.f32 %v282, %v282
        %v355 = vmul.f32 %v283, %v283
        %v356 = vmul.f32 %v284, %v284
        %v357 = vmul.f32 %v285, %v285
        %v358 = vmul.f32 %v286, %v286
        %v359 = vmul.f32 %v287, %v287
        %v360 = vmul.f32 %v288, %v288
        %v361 = vmul.f32 %v289, %v289
        %v362 = vmul.f32 %v290, %v290
        %v363 = vmul.f32 %v291, %v291
        %v364 = vmul.f32 %v292, %v292
        %v365 = vmul.f32 %v293, %v293
        %v366 = vmul.f32 %v294, %v294
        %v367 = vmul.f32 %v295, %v295
        %v368 = vmul.f32 %v296, %v296
        %v369 = vmul.f32 %v297, %v297
        %s370 = scalar_lea.vmem %s1, 1
        %v371 = vld [vmem:[%s370] sm:$0x1]
        %372 = vadd.xlane.f32.xlu0 %v306
        %v373 = vpop.xlane.xlu0 %372
        %374 = vadd.xlane.f32.xlu0 %v307
        %v375 = vpop.xlane.xlu0 %374
        %376 = vadd.xlane.f32.xlu0 %v308
        %v377 = vpop.xlane.xlu0 %376
        %378 = vadd.xlane.f32.xlu0 %v309
        %v379 = vpop.xlane.xlu0 %378
        %380 = vadd.xlane.f32.xlu0 %v310
        %v381 = vpop.xlane.xlu0 %380
        %382 = vadd.xlane.f32.xlu0 %v311
        %v383 = vpop.xlane.xlu0 %382
        %384 = vadd.xlane.f32.xlu0 %v312
        %v385 = vpop.xlane.xlu0 %384
        %386 = vadd.xlane.f32.xlu0 %v313
        %v387 = vpop.xlane.xlu0 %386
        %388 = vadd.xlane.f32.xlu0 %v314
        %v389 = vpop.xlane.xlu0 %388
        %390 = vadd.xlane.f32.xlu0 %v315
        %v391 = vpop.xlane.xlu0 %390
        %392 = vadd.xlane.f32.xlu0 %v316
        %v393 = vpop.xlane.xlu0 %392
        %394 = vadd.xlane.f32.xlu0 %v317
        %v395 = vpop.xlane.xlu0 %394
        %396 = vadd.xlane.f32.xlu0 %v318
        %v397 = vpop.xlane.xlu0 %396
        %398 = vadd.xlane.f32.xlu0 %v319
        %v399 = vpop.xlane.xlu0 %398
        %400 = vadd.xlane.f32.xlu0 %v320
        %v401 = vpop.xlane.xlu0 %400
        %402 = vadd.xlane.f32.xlu0 %v321
        %v403 = vpop.xlane.xlu0 %402
        %404 = vadd.xlane.f32.xlu0 %v322
        %v405 = vpop.xlane.xlu0 %404
        %406 = vadd.xlane.f32.xlu0 %v323
        %v407 = vpop.xlane.xlu0 %406
        %408 = vadd.xlane.f32.xlu0 %v324
        %v409 = vpop.xlane.xlu0 %408
        %410 = vadd.xlane.f32.xlu0 %v325
        %v411 = vpop.xlane.xlu0 %410
        %412 = vadd.xlane.f32.xlu0 %v326
        %v413 = vpop.xlane.xlu0 %412
        %414 = vadd.xlane.f32.xlu0 %v327
        %v415 = vpop.xlane.xlu0 %414
        %416 = vadd.xlane.f32.xlu0 %v328
        %v417 = vpop.xlane.xlu0 %416
        %418 = vadd.xlane.f32.xlu0 %v329
        %v419 = vpop.xlane.xlu0 %418
        %420 = vadd.xlane.f32.xlu0 %v330
        %v421 = vpop.xlane.xlu0 %420
        %422 = vadd.xlane.f32.xlu0 %v331
        %v423 = vpop.xlane.xlu0 %422
        %424 = vadd.xlane.f32.xlu0 %v332
        %v425 = vpop.xlane.xlu0 %424
        %426 = vadd.xlane.f32.xlu0 %v333
        %v427 = vpop.xlane.xlu0 %426
        %428 = vadd.xlane.f32.xlu0 %v334
        %v429 = vpop.xlane.xlu0 %428
        %430 = vadd.xlane.f32.xlu0 %v335
        %v431 = vpop.xlane.xlu0 %430
        %432 = vadd.xlane.f32.xlu0 %v336
        %v433 = vpop.xlane.xlu0 %432
        %434 = vadd.xlane.f32.xlu0 %v337
        %v435 = vpop.xlane.xlu0 %434
        %v437 = vlaneseq
        %v438 = vshrl.u32 %v437, 7
        %v439 = vsub.s32 0, %v438
        %v440 = vrot.slane %v371, %v439
        %v442 = vmul.f32 %v306, %v440
        %v443 = vmul.f32 %v307, %v440
        %v444 = vmul.f32 %v308, %v440
        %v445 = vmul.f32 %v309, %v440
        %v446 = vmul.f32 %v310, %v440
        %v447 = vmul.f32 %v311, %v440
        %v448 = vmul.f32 %v312, %v440
        %v449 = vmul.f32 %v313, %v440
        %v450 = vmul.f32 %v314, %v440
        %v451 = vmul.f32 %v315, %v440
        %v452 = vmul.f32 %v316, %v440
        %v453 = vmul.f32 %v317, %v440
        %v454 = vmul.f32 %v318, %v440
        %v455 = vmul.f32 %v319, %v440
        %v456 = vmul.f32 %v320, %v440
        %v457 = vmul.f32 %v321, %v440
        %v458 = vmul.f32 %v322, %v440
        %v459 = vmul.f32 %v323, %v440
        %v460 = vmul.f32 %v324, %v440
        %v461 = vmul.f32 %v325, %v440
        %v462 = vmul.f32 %v326, %v440
        %v463 = vmul.f32 %v327, %v440
        %v464 = vmul.f32 %v328, %v440
        %v465 = vmul.f32 %v329, %v440
        %v466 = vmul.f32 %v330, %v440
        %v467 = vmul.f32 %v331, %v440
        %v468 = vmul.f32 %v332, %v440
        %v469 = vmul.f32 %v333, %v440
        %v470 = vmul.f32 %v334, %v440
        %v471 = vmul.f32 %v335, %v440
        %v472 = vmul.f32 %v336, %v440
        %v473 = vmul.f32 %v337, %v440
        %474 = vadd.xlane.f32.xlu0 %v442
        %v475 = vpop.xlane.xlu0 %474
        %476 = vadd.xlane.f32.xlu0 %v443
        %v477 = vpop.xlane.xlu0 %476
        %478 = vadd.xlane.f32.xlu0 %v444
        %v479 = vpop.xlane.xlu0 %478
        %480 = vadd.xlane.f32.xlu0 %v445
        %v481 = vpop.xlane.xlu0 %480
        %482 = vadd.xlane.f32.xlu0 %v446
        %v483 = vpop.xlane.xlu0 %482
        %484 = vadd.xlane.f32.xlu0 %v447
        %v485 = vpop.xlane.xlu0 %484
        %486 = vadd.xlane.f32.xlu0 %v448
        %v487 = vpop.xlane.xlu0 %486
        %488 = vadd.xlane.f32.xlu0 %v449
        %v489 = vpop.xlane.xlu0 %488
        %490 = vadd.xlane.f32.xlu0 %v450
        %v491 = vpop.xlane.xlu0 %490
        %492 = vadd.xlane.f32.xlu0 %v451
        %v493 = vpop.xlane.xlu0 %492
        %494 = vadd.xlane.f32.xlu0 %v452
        %v495 = vpop.xlane.xlu0 %494
        %496 = vadd.xlane.f32.xlu0 %v453
        %v497 = vpop.xlane.xlu0 %496
        %498 = vadd.xlane.f32.xlu0 %v454
        %v499 = vpop.xlane.xlu0 %498
        %500 = vadd.xlane.f32.xlu0 %v455
        %v501 = vpop.xlane.xlu0 %500
        %502 = vadd.xlane.f32.xlu0 %v456
        %v503 = vpop.xlane.xlu0 %502
        %504 = vadd.xlane.f32.xlu0 %v457
        %v505 = vpop.xlane.xlu0 %504
        %506 = vadd.xlane.f32.xlu0 %v458
        %v507 = vpop.xlane.xlu0 %506
        %508 = vadd.xlane.f32.xlu0 %v459
        %v509 = vpop.xlane.xlu0 %508
        %510 = vadd.xlane.f32.xlu0 %v460
        %v511 = vpop.xlane.xlu0 %510
        %512 = vadd.xlane.f32.xlu0 %v461
        %v513 = vpop.xlane.xlu0 %512
        %514 = vadd.xlane.f32.xlu0 %v462
        %v515 = vpop.xlane.xlu0 %514
        %516 = vadd.xlane.f32.xlu0 %v463
        %v517 = vpop.xlane.xlu0 %516
        %518 = vadd.xlane.f32.xlu0 %v464
        %v519 = vpop.xlane.xlu0 %518
        %520 = vadd.xlane.f32.xlu0 %v465
        %v521 = vpop.xlane.xlu0 %520
        %522 = vadd.xlane.f32.xlu0 %v466
        %v523 = vpop.xlane.xlu0 %522
        %524 = vadd.xlane.f32.xlu0 %v467
        %v525 = vpop.xlane.xlu0 %524
        %526 = vadd.xlane.f32.xlu0 %v468
        %v527 = vpop.xlane.xlu0 %526
        %528 = vadd.xlane.f32.xlu0 %v469
        %v529 = vpop.xlane.xlu0 %528
        %530 = vadd.xlane.f32.xlu0 %v470
        %v531 = vpop.xlane.xlu0 %530
        %532 = vadd.xlane.f32.xlu0 %v471
        %v533 = vpop.xlane.xlu0 %532
        %534 = vadd.xlane.f32.xlu0 %v472
        %v535 = vpop.xlane.xlu0 %534
        %536 = vadd.xlane.f32.xlu0 %v473
        %v537 = vpop.xlane.xlu0 %536
        %v538 = vsub.f32 %v373, %v475
        %v539 = vsub.f32 %v375, %v477
        %v540 = vsub.f32 %v377, %v479
        %v541 = vsub.f32 %v379, %v481
        %v542 = vsub.f32 %v381, %v483
        %v543 = vsub.f32 %v383, %v485
        %v544 = vsub.f32 %v385, %v487
        %v545 = vsub.f32 %v387, %v489
        %v546 = vsub.f32 %v389, %v491
        %v547 = vsub.f32 %v391, %v493
        %v548 = vsub.f32 %v393, %v495
        %v549 = vsub.f32 %v395, %v497
        %v550 = vsub.f32 %v397, %v499
        %v551 = vsub.f32 %v399, %v501
        %v552 = vsub.f32 %v401, %v503
        %v553 = vsub.f32 %v403, %v505
        %v554 = vsub.f32 %v405, %v507
        %v555 = vsub.f32 %v407, %v509
        %v556 = vsub.f32 %v409, %v511
        %v557 = vsub.f32 %v411, %v513
        %v558 = vsub.f32 %v413, %v515
        %v559 = vsub.f32 %v415, %v517
        %v560 = vsub.f32 %v417, %v519
        %v561 = vsub.f32 %v419, %v521
        %v562 = vsub.f32 %v421, %v523
        %v563 = vsub.f32 %v423, %v525
        %v564 = vsub.f32 %v425, %v527
        %v565 = vsub.f32 %v427, %v529
        %v566 = vsub.f32 %v429, %v531
        %v567 = vsub.f32 %v431, %v533
        %v568 = vsub.f32 %v433, %v535
        %v569 = vsub.f32 %v435, %v537
        %570 = vadd.xlane.f32.xlu0 %v266
        %v571 = vpop.xlane.xlu0 %570
        %572 = vadd.xlane.f32.xlu0 %v267
        %v573 = vpop.xlane.xlu0 %572
        %574 = vadd.xlane.f32.xlu0 %v268
        %v575 = vpop.xlane.xlu0 %574
        %576 = vadd.xlane.f32.xlu0 %v269
        %v577 = vpop.xlane.xlu0 %576
        %578 = vadd.xlane.f32.xlu0 %v270
        %v579 = vpop.xlane.xlu0 %578
        %580 = vadd.xlane.f32.xlu0 %v271
        %v581 = vpop.xlane.xlu0 %580
        %582 = vadd.xlane.f32.xlu0 %v272
        %v583 = vpop.xlane.xlu0 %582
        %584 = vadd.xlane.f32.xlu0 %v273
        %v585 = vpop.xlane.xlu0 %584
        %586 = vadd.xlane.f32.xlu0 %v274
        %v587 = vpop.xlane.xlu0 %586
        %588 = vadd.xlane.f32.xlu0 %v275
        %v589 = vpop.xlane.xlu0 %588
        %590 = vadd.xlane.f32.xlu0 %v276
        %v591 = vpop.xlane.xlu0 %590
        %592 = vadd.xlane.f32.xlu0 %v277
        %v593 = vpop.xlane.xlu0 %592
        %594 = vadd.xlane.f32.xlu0 %v278
        %v595 = vpop.xlane.xlu0 %594
        %596 = vadd.xlane.f32.xlu0 %v279
        %v597 = vpop.xlane.xlu0 %596
        %598 = vadd.xlane.f32.xlu0 %v280
        %v599 = vpop.xlane.xlu0 %598
        %600 = vadd.xlane.f32.xlu0 %v281
        %v601 = vpop.xlane.xlu0 %600
        %602 = vadd.xlane.f32.xlu0 %v282
        %v603 = vpop.xlane.xlu0 %602
        %604 = vadd.xlane.f32.xlu0 %v283
        %v605 = vpop.xlane.xlu0 %604
        %606 = vadd.xlane.f32.xlu0 %v284
        %v607 = vpop.xlane.xlu0 %606
        %608 = vadd.xlane.f32.xlu0 %v285
        %v609 = vpop.xlane.xlu0 %608
        %610 = vadd.xlane.f32.xlu0 %v286
        %v611 = vpop.xlane.xlu0 %610
        %612 = vadd.xlane.f32.xlu0 %v287
        %v613 = vpop.xlane.xlu0 %612
        %614 = vadd.xlane.f32.xlu0 %v288
        %v615 = vpop.xlane.xlu0 %614
        %616 = vadd.xlane.f32.xlu0 %v289
        %v617 = vpop.xlane.xlu0 %616
        %618 = vadd.xlane.f32.xlu0 %v290
        %v619 = vpop.xlane.xlu0 %618
        %620 = vadd.xlane.f32.xlu0 %v291
        %v621 = vpop.xlane.xlu0 %620
        %622 = vadd.xlane.f32.xlu0 %v292
        %v623 = vpop.xlane.xlu0 %622
        %624 = vadd.xlane.f32.xlu0 %v293
        %v625 = vpop.xlane.xlu0 %624
        %626 = vadd.xlane.f32.xlu0 %v294
        %v627 = vpop.xlane.xlu0 %626
        %628 = vadd.xlane.f32.xlu0 %v295
        %v629 = vpop.xlane.xlu0 %628
        %630 = vadd.xlane.f32.xlu0 %v296
        %v631 = vpop.xlane.xlu0 %630
        %632 = vadd.xlane.f32.xlu0 %v297
        %v633 = vpop.xlane.xlu0 %632
        %v634 = vmul.f32 %v266, %v440
        %v635 = vmul.f32 %v267, %v440
        %v636 = vmul.f32 %v268, %v440
        %v637 = vmul.f32 %v269, %v440
        %v638 = vmul.f32 %v270, %v440
        %v639 = vmul.f32 %v271, %v440
        %v640 = vmul.f32 %v272, %v440
        %v641 = vmul.f32 %v273, %v440
        %v642 = vmul.f32 %v274, %v440
        %v643 = vmul.f32 %v275, %v440
        %v644 = vmul.f32 %v276, %v440
        %v645 = vmul.f32 %v277, %v440
        %v646 = vmul.f32 %v278, %v440
        %v647 = vmul.f32 %v279, %v440
        %v648 = vmul.f32 %v280, %v440
        %v649 = vmul.f32 %v281, %v440
        %v650 = vmul.f32 %v282, %v440
        %v651 = vmul.f32 %v283, %v440
        %v652 = vmul.f32 %v284, %v440
        %v653 = vmul.f32 %v285, %v440
        %v654 = vmul.f32 %v286, %v440
        %v655 = vmul.f32 %v287, %v440
        %v656 = vmul.f32 %v288, %v440
        %v657 = vmul.f32 %v289, %v440
        %v658 = vmul.f32 %v290, %v440
        %v659 = vmul.f32 %v291, %v440
        %v660 = vmul.f32 %v292, %v440
        %v661 = vmul.f32 %v293, %v440
        %v662 = vmul.f32 %v294, %v440
        %v663 = vmul.f32 %v295, %v440
        %v664 = vmul.f32 %v296, %v440
        %v665 = vmul.f32 %v297, %v440
        %666 = vadd.xlane.f32.xlu0 %v634
        %v667 = vpop.xlane.xlu0 %666
        %668 = vadd.xlane.f32.xlu0 %v635
        %v669 = vpop.xlane.xlu0 %668
        %670 = vadd.xlane.f32.xlu0 %v636
        %v671 = vpop.xlane.xlu0 %670
        %672 = vadd.xlane.f32.xlu0 %v637
        %v673 = vpop.xlane.xlu0 %672
        %674 = vadd.xlane.f32.xlu0 %v638
        %v675 = vpop.xlane.xlu0 %674
        %676 = vadd.xlane.f32.xlu0 %v639
        %v677 = vpop.xlane.xlu0 %676
        %678 = vadd.xlane.f32.xlu0 %v640
        %v679 = vpop.xlane.xlu0 %678
        %680 = vadd.xlane.f32.xlu0 %v641
        %v681 = vpop.xlane.xlu0 %680
        %682 = vadd.xlane.f32.xlu0 %v642
        %v683 = vpop.xlane.xlu0 %682
        %684 = vadd.xlane.f32.xlu0 %v643
        %v685 = vpop.xlane.xlu0 %684
        %686 = vadd.xlane.f32.xlu0 %v644
        %v687 = vpop.xlane.xlu0 %686
        %688 = vadd.xlane.f32.xlu0 %v645
        %v689 = vpop.xlane.xlu0 %688
        %690 = vadd.xlane.f32.xlu0 %v646
        %v691 = vpop.xlane.xlu0 %690
        %692 = vadd.xlane.f32.xlu0 %v647
        %v693 = vpop.xlane.xlu0 %692
        %694 = vadd.xlane.f32.xlu0 %v648
        %v695 = vpop.xlane.xlu0 %694
        %696 = vadd.xlane.f32.xlu0 %v649
        %v697 = vpop.xlane.xlu0 %696
        %698 = vadd.xlane.f32.xlu0 %v650
        %v699 = vpop.xlane.xlu0 %698
        %700 = vadd.xlane.f32.xlu0 %v651
        %v701 = vpop.xlane.xlu0 %700
        %702 = vadd.xlane.f32.xlu0 %v652
        %v703 = vpop.xlane.xlu0 %702
        %704 = vadd.xlane.f32.xlu0 %v653
        %v705 = vpop.xlane.xlu0 %704
        %706 = vadd.xlane.f32.xlu0 %v654
        %v707 = vpop.xlane.xlu0 %706
        %708 = vadd.xlane.f32.xlu0 %v655
        %v709 = vpop.xlane.xlu0 %708
        %710 = vadd.xlane.f32.xlu0 %v656
        %v711 = vpop.xlane.xlu0 %710
        %712 = vadd.xlane.f32.xlu0 %v657
        %v713 = vpop.xlane.xlu0 %712
        %714 = vadd.xlane.f32.xlu0 %v658
        %v715 = vpop.xlane.xlu0 %714
        %716 = vadd.xlane.f32.xlu0 %v659
        %v717 = vpop.xlane.xlu0 %716
        %718 = vadd.xlane.f32.xlu0 %v660
        %v719 = vpop.xlane.xlu0 %718
        %720 = vadd.xlane.f32.xlu0 %v661
        %v721 = vpop.xlane.xlu0 %720
        %722 = vadd.xlane.f32.xlu0 %v662
        %v723 = vpop.xlane.xlu0 %722
        %724 = vadd.xlane.f32.xlu0 %v663
        %v725 = vpop.xlane.xlu0 %724
        %726 = vadd.xlane.f32.xlu0 %v664
        %v727 = vpop.xlane.xlu0 %726
        %728 = vadd.xlane.f32.xlu0 %v665
        %v729 = vpop.xlane.xlu0 %728
        %v730 = vsub.f32 %v571, %v667
        %v731 = vsub.f32 %v573, %v669
        %v732 = vsub.f32 %v575, %v671
        %v733 = vsub.f32 %v577, %v673
        %v734 = vsub.f32 %v579, %v675
        %v735 = vsub.f32 %v581, %v677
        %v736 = vsub.f32 %v583, %v679
        %v737 = vsub.f32 %v585, %v681
        %v738 = vsub.f32 %v587, %v683
        %v739 = vsub.f32 %v589, %v685
        %v740 = vsub.f32 %v591, %v687
        %v741 = vsub.f32 %v593, %v689
        %v742 = vsub.f32 %v595, %v691
        %v743 = vsub.f32 %v597, %v693
        %v744 = vsub.f32 %v599, %v695
        %v745 = vsub.f32 %v601, %v697
        %v746 = vsub.f32 %v603, %v699
        %v747 = vsub.f32 %v605, %v701
        %v748 = vsub.f32 %v607, %v703
        %v749 = vsub.f32 %v609, %v705
        %v750 = vsub.f32 %v611, %v707
        %v751 = vsub.f32 %v613, %v709
        %v752 = vsub.f32 %v615, %v711
        %v753 = vsub.f32 %v617, %v713
        %v754 = vsub.f32 %v619, %v715
        %v755 = vsub.f32 %v621, %v717
        %v756 = vsub.f32 %v623, %v719
        %v757 = vsub.f32 %v625, %v721
        %v758 = vsub.f32 %v627, %v723
        %v759 = vsub.f32 %v629, %v725
        %v760 = vsub.f32 %v631, %v727
        %v761 = vsub.f32 %v633, %v729
        %762 = vadd.xlane.f32.xlu0 %v338
        %v763 = vpop.xlane.xlu0 %762
        %764 = vadd.xlane.f32.xlu0 %v339
        %v765 = vpop.xlane.xlu0 %764
        %766 = vadd.xlane.f32.xlu0 %v340
        %v767 = vpop.xlane.xlu0 %766
        %768 = vadd.xlane.f32.xlu0 %v341
        %v769 = vpop.xlane.xlu0 %768
        %770 = vadd.xlane.f32.xlu0 %v342
        %v771 = vpop.xlane.xlu0 %770
        %772 = vadd.xlane.f32.xlu0 %v343
        %v773 = vpop.xlane.xlu0 %772
        %774 = vadd.xlane.f32.xlu0 %v344
        %v775 = vpop.xlane.xlu0 %774
        %776 = vadd.xlane.f32.xlu0 %v345
        %v777 = vpop.xlane.xlu0 %776
        %778 = vadd.xlane.f32.xlu0 %v346
        %v779 = vpop.xlane.xlu0 %778
        %780 = vadd.xlane.f32.xlu0 %v347
        %v781 = vpop.xlane.xlu0 %780
        %782 = vadd.xlane.f32.xlu0 %v348
        %v783 = vpop.xlane.xlu0 %782
        %784 = vadd.xlane.f32.xlu0 %v349
        %v785 = vpop.xlane.xlu0 %784
        %786 = vadd.xlane.f32.xlu0 %v350
        %v787 = vpop.xlane.xlu0 %786
        %788 = vadd.xlane.f32.xlu0 %v351
        %v789 = vpop.xlane.xlu0 %788
        %790 = vadd.xlane.f32.xlu0 %v352
        %v791 = vpop.xlane.xlu0 %790
        %792 = vadd.xlane.f32.xlu0 %v353
        %v793 = vpop.xlane.xlu0 %792
        %794 = vadd.xlane.f32.xlu0 %v354
        %v795 = vpop.xlane.xlu0 %794
        %796 = vadd.xlane.f32.xlu0 %v355
        %v797 = vpop.xlane.xlu0 %796
        %798 = vadd.xlane.f32.xlu0 %v356
        %v799 = vpop.xlane.xlu0 %798
        %800 = vadd.xlane.f32.xlu0 %v357
        %v801 = vpop.xlane.xlu0 %800
        %802 = vadd.xlane.f32.xlu0 %v358
        %v803 = vpop.xlane.xlu0 %802
        %804 = vadd.xlane.f32.xlu0 %v359
        %v805 = vpop.xlane.xlu0 %804
        %806 = vadd.xlane.f32.xlu0 %v360
        %v807 = vpop.xlane.xlu0 %806
        %808 = vadd.xlane.f32.xlu0 %v361
        %v809 = vpop.xlane.xlu0 %808
        %810 = vadd.xlane.f32.xlu0 %v362
        %v811 = vpop.xlane.xlu0 %810
        %812 = vadd.xlane.f32.xlu0 %v363
        %v813 = vpop.xlane.xlu0 %812
        %814 = vadd.xlane.f32.xlu0 %v364
        %v815 = vpop.xlane.xlu0 %814
        %816 = vadd.xlane.f32.xlu0 %v365
        %v817 = vpop.xlane.xlu0 %816
        %818 = vadd.xlane.f32.xlu0 %v366
        %v819 = vpop.xlane.xlu0 %818
        %820 = vadd.xlane.f32.xlu0 %v367
        %v821 = vpop.xlane.xlu0 %820
        %822 = vadd.xlane.f32.xlu0 %v368
        %v823 = vpop.xlane.xlu0 %822
        %824 = vadd.xlane.f32.xlu0 %v369
        %v825 = vpop.xlane.xlu0 %824
        %v826 = vmul.f32 %v338, %v440
        %v827 = vmul.f32 %v339, %v440
        %v828 = vmul.f32 %v340, %v440
        %v829 = vmul.f32 %v341, %v440
        %v830 = vmul.f32 %v342, %v440
        %v831 = vmul.f32 %v343, %v440
        %v832 = vmul.f32 %v344, %v440
        %v833 = vmul.f32 %v345, %v440
        %v834 = vmul.f32 %v346, %v440
        %v835 = vmul.f32 %v347, %v440
        %v836 = vmul.f32 %v348, %v440
        %v837 = vmul.f32 %v349, %v440
        %v838 = vmul.f32 %v350, %v440
        %v839 = vmul.f32 %v351, %v440
        %v840 = vmul.f32 %v352, %v440
        %v841 = vmul.f32 %v353, %v440
        %v842 = vmul.f32 %v354, %v440
        %v843 = vmul.f32 %v355, %v440
        %v844 = vmul.f32 %v356, %v440
        %v845 = vmul.f32 %v357, %v440
        %v846 = vmul.f32 %v358, %v440
        %v847 = vmul.f32 %v359, %v440
        %v848 = vmul.f32 %v360, %v440
        %v849 = vmul.f32 %v361, %v440
        %v850 = vmul.f32 %v362, %v440
        %v851 = vmul.f32 %v363, %v440
        %v852 = vmul.f32 %v364, %v440
        %v853 = vmul.f32 %v365, %v440
        %v854 = vmul.f32 %v366, %v440
        %v855 = vmul.f32 %v367, %v440
        %v856 = vmul.f32 %v368, %v440
        %v857 = vmul.f32 %v369, %v440
        %858 = vadd.xlane.f32.xlu0 %v826
        %v859 = vpop.xlane.xlu0 %858
        %860 = vadd.xlane.f32.xlu0 %v827
        %v861 = vpop.xlane.xlu0 %860
        %862 = vadd.xlane.f32.xlu0 %v828
        %v863 = vpop.xlane.xlu0 %862
        %864 = vadd.xlane.f32.xlu0 %v829
        %v865 = vpop.xlane.xlu0 %864
        %866 = vadd.xlane.f32.xlu0 %v830
        %v867 = vpop.xlane.xlu0 %866
        %868 = vadd.xlane.f32.xlu0 %v831
        %v869 = vpop.xlane.xlu0 %868
        %870 = vadd.xlane.f32.xlu0 %v832
        %v871 = vpop.xlane.xlu0 %870
        %872 = vadd.xlane.f32.xlu0 %v833
        %v873 = vpop.xlane.xlu0 %872
        %874 = vadd.xlane.f32.xlu0 %v834
        %v875 = vpop.xlane.xlu0 %874
        %876 = vadd.xlane.f32.xlu0 %v835
        %v877 = vpop.xlane.xlu0 %876
        %878 = vadd.xlane.f32.xlu0 %v836
        %v879 = vpop.xlane.xlu0 %878
        %880 = vadd.xlane.f32.xlu0 %v837
        %v881 = vpop.xlane.xlu0 %880
        %882 = vadd.xlane.f32.xlu0 %v838
        %v883 = vpop.xlane.xlu0 %882
        %884 = vadd.xlane.f32.xlu0 %v839
        %v885 = vpop.xlane.xlu0 %884
        %886 = vadd.xlane.f32.xlu0 %v840
        %v887 = vpop.xlane.xlu0 %886
        %888 = vadd.xlane.f32.xlu0 %v841
        %v889 = vpop.xlane.xlu0 %888
        %890 = vadd.xlane.f32.xlu0 %v842
        %v891 = vpop.xlane.xlu0 %890
        %892 = vadd.xlane.f32.xlu0 %v843
        %v893 = vpop.xlane.xlu0 %892
        %894 = vadd.xlane.f32.xlu0 %v844
        %v895 = vpop.xlane.xlu0 %894
        %896 = vadd.xlane.f32.xlu0 %v845
        %v897 = vpop.xlane.xlu0 %896
        %898 = vadd.xlane.f32.xlu0 %v846
        %v899 = vpop.xlane.xlu0 %898
        %900 = vadd.xlane.f32.xlu0 %v847
        %v901 = vpop.xlane.xlu0 %900
        %902 = vadd.xlane.f32.xlu0 %v848
        %v903 = vpop.xlane.xlu0 %902
        %904 = vadd.xlane.f32.xlu0 %v849
        %v905 = vpop.xlane.xlu0 %904
        %906 = vadd.xlane.f32.xlu0 %v850
        %v907 = vpop.xlane.xlu0 %906
        %908 = vadd.xlane.f32.xlu0 %v851
        %v909 = vpop.xlane.xlu0 %908
        %910 = vadd.xlane.f32.xlu0 %v852
        %v911 = vpop.xlane.xlu0 %910
        %912 = vadd.xlane.f32.xlu0 %v853
        %v913 = vpop.xlane.xlu0 %912
        %914 = vadd.xlane.f32.xlu0 %v854
        %v915 = vpop.xlane.xlu0 %914
        %916 = vadd.xlane.f32.xlu0 %v855
        %v917 = vpop.xlane.xlu0 %916
        %918 = vadd.xlane.f32.xlu0 %v856
        %v919 = vpop.xlane.xlu0 %918
        %920 = vadd.xlane.f32.xlu0 %v857
        %v921 = vpop.xlane.xlu0 %920
        %v922 = vsub.f32 %v763, %v859
        %v923 = vsub.f32 %v765, %v861
        %v924 = vsub.f32 %v767, %v863
        %v925 = vsub.f32 %v769, %v865
        %v926 = vsub.f32 %v771, %v867
        %v927 = vsub.f32 %v773, %v869
        %v928 = vsub.f32 %v775, %v871
        %v929 = vsub.f32 %v777, %v873
        %v930 = vsub.f32 %v779, %v875
        %v931 = vsub.f32 %v781, %v877
        %v932 = vsub.f32 %v783, %v879
        %v933 = vsub.f32 %v785, %v881
        %v934 = vsub.f32 %v787, %v883
        %v935 = vsub.f32 %v789, %v885
        %v936 = vsub.f32 %v791, %v887
        %v937 = vsub.f32 %v793, %v889
        %v938 = vsub.f32 %v795, %v891
        %v939 = vsub.f32 %v797, %v893
        %v940 = vsub.f32 %v799, %v895
        %v941 = vsub.f32 %v801, %v897
        %v942 = vsub.f32 %v803, %v899
        %v943 = vsub.f32 %v805, %v901
        %v944 = vsub.f32 %v807, %v903
        %v945 = vsub.f32 %v809, %v905
        %v946 = vsub.f32 %v811, %v907
        %v947 = vsub.f32 %v813, %v909
        %v948 = vsub.f32 %v815, %v911
        %v949 = vsub.f32 %v817, %v913
        %v950 = vsub.f32 %v819, %v915
        %v951 = vsub.f32 %v821, %v917
        %v952 = vsub.f32 %v823, %v919
        %v953 = vsub.f32 %v825, %v921
        %v954 = vstv %s298
        %v955 = vadd.f32 %v538, %v954
        %v956 = vadd.f32 %v539, %v954
        %v957 = vadd.f32 %v540, %v954
        %v958 = vadd.f32 %v541, %v954
        %v959 = vadd.f32 %v542, %v954
        %v960 = vadd.f32 %v543, %v954
        %v961 = vadd.f32 %v544, %v954
        %v962 = vadd.f32 %v545, %v954
        %v963 = vadd.f32 %v546, %v954
        %v964 = vadd.f32 %v547, %v954
        %v965 = vadd.f32 %v548, %v954
        %v966 = vadd.f32 %v549, %v954
        %v967 = vadd.f32 %v550, %v954
        %v968 = vadd.f32 %v551, %v954
        %v969 = vadd.f32 %v552, %v954
        %v970 = vadd.f32 %v553, %v954
        %v971 = vadd.f32 %v554, %v954
        %v972 = vadd.f32 %v555, %v954
        %v973 = vadd.f32 %v556, %v954
        %v974 = vadd.f32 %v557, %v954
        %v975 = vadd.f32 %v558, %v954
        %v976 = vadd.f32 %v559, %v954
        %v977 = vadd.f32 %v560, %v954
        %v978 = vadd.f32 %v561, %v954
        %v979 = vadd.f32 %v562, %v954
        %v980 = vadd.f32 %v563, %v954
        %v981 = vadd.f32 %v564, %v954
        %v982 = vadd.f32 %v565, %v954
        %v983 = vadd.f32 %v566, %v954
        %v984 = vadd.f32 %v567, %v954
        %v985 = vadd.f32 %v568, %v954
        %v986 = vadd.f32 %v569, %v954
        %v987 = vmax.f32 %v955, 0.0
        %v988 = vmax.f32 %v956, 0.0
        %v989 = vmax.f32 %v957, 0.0
        %v990 = vmax.f32 %v958, 0.0
        %v991 = vmax.f32 %v959, 0.0
        %v992 = vmax.f32 %v960, 0.0
        %v993 = vmax.f32 %v961, 0.0
        %v994 = vmax.f32 %v962, 0.0
        %v995 = vmax.f32 %v963, 0.0
        %v996 = vmax.f32 %v964, 0.0
        %v997 = vmax.f32 %v965, 0.0
        %v998 = vmax.f32 %v966, 0.0
        %v999 = vmax.f32 %v967, 0.0
        %v1000 = vmax.f32 %v968, 0.0
        %v1001 = vmax.f32 %v969, 0.0
        %v1002 = vmax.f32 %v970, 0.0
        %v1003 = vmax.f32 %v971, 0.0
        %v1004 = vmax.f32 %v972, 0.0
        %v1005 = vmax.f32 %v973, 0.0
        %v1006 = vmax.f32 %v974, 0.0
        %v1007 = vmax.f32 %v975, 0.0
        %v1008 = vmax.f32 %v976, 0.0
        %v1009 = vmax.f32 %v977, 0.0
        %v1010 = vmax.f32 %v978, 0.0
        %v1011 = vmax.f32 %v979, 0.0
        %v1012 = vmax.f32 %v980, 0.0
        %v1013 = vmax.f32 %v981, 0.0
        %v1014 = vmax.f32 %v982, 0.0
        %v1015 = vmax.f32 %v983, 0.0
        %v1016 = vmax.f32 %v984, 0.0
        %v1017 = vmax.f32 %v985, 0.0
        %v1018 = vmax.f32 %v986, 0.0
        %v1019 = vadd.f32 %v475, %v954
        %v1020 = vadd.f32 %v477, %v954
        %v1021 = vadd.f32 %v479, %v954
        %v1022 = vadd.f32 %v481, %v954
        %v1023 = vadd.f32 %v483, %v954
        %v1024 = vadd.f32 %v485, %v954
        %v1025 = vadd.f32 %v487, %v954
        %v1026 = vadd.f32 %v489, %v954
        %v1027 = vadd.f32 %v491, %v954
        %v1028 = vadd.f32 %v493, %v954
        %v1029 = vadd.f32 %v495, %v954
        %v1030 = vadd.f32 %v497, %v954
        %v1031 = vadd.f32 %v499, %v954
        %v1032 = vadd.f32 %v501, %v954
        %v1033 = vadd.f32 %v503, %v954
        %v1034 = vadd.f32 %v505, %v954
        %v1035 = vadd.f32 %v507, %v954
        %v1036 = vadd.f32 %v509, %v954
        %v1037 = vadd.f32 %v511, %v954
        %v1038 = vadd.f32 %v513, %v954
        %v1039 = vadd.f32 %v515, %v954
        %v1040 = vadd.f32 %v517, %v954
        %v1041 = vadd.f32 %v519, %v954
        %v1042 = vadd.f32 %v521, %v954
        %v1043 = vadd.f32 %v523, %v954
        %v1044 = vadd.f32 %v525, %v954
        %v1045 = vadd.f32 %v527, %v954
        %v1046 = vadd.f32 %v529, %v954
        %v1047 = vadd.f32 %v531, %v954
        %v1048 = vadd.f32 %v533, %v954
        %v1049 = vadd.f32 %v535, %v954
        %v1050 = vadd.f32 %v537, %v954
        %v1051 = vmax.f32 %v1019, 0.0
        %v1052 = vmax.f32 %v1020, 0.0
        %v1053 = vmax.f32 %v1021, 0.0
        %v1054 = vmax.f32 %v1022, 0.0
        %v1055 = vmax.f32 %v1023, 0.0
        %v1056 = vmax.f32 %v1024, 0.0
        %v1057 = vmax.f32 %v1025, 0.0
        %v1058 = vmax.f32 %v1026, 0.0
        %v1059 = vmax.f32 %v1027, 0.0
        %v1060 = vmax.f32 %v1028, 0.0
        %v1061 = vmax.f32 %v1029, 0.0
        %v1062 = vmax.f32 %v1030, 0.0
        %v1063 = vmax.f32 %v1031, 0.0
        %v1064 = vmax.f32 %v1032, 0.0
        %v1065 = vmax.f32 %v1033, 0.0
        %v1066 = vmax.f32 %v1034, 0.0
        %v1067 = vmax.f32 %v1035, 0.0
        %v1068 = vmax.f32 %v1036, 0.0
        %v1069 = vmax.f32 %v1037, 0.0
        %v1070 = vmax.f32 %v1038, 0.0
        %v1071 = vmax.f32 %v1039, 0.0
        %v1072 = vmax.f32 %v1040, 0.0
        %v1073 = vmax.f32 %v1041, 0.0
        %v1074 = vmax.f32 %v1042, 0.0
        %v1075 = vmax.f32 %v1043, 0.0
        %v1076 = vmax.f32 %v1044, 0.0
        %v1077 = vmax.f32 %v1045, 0.0
        %v1078 = vmax.f32 %v1046, 0.0
        %v1079 = vmax.f32 %v1047, 0.0
        %v1080 = vmax.f32 %v1048, 0.0
        %v1081 = vmax.f32 %v1049, 0.0
        %v1082 = vmax.f32 %v1050, 0.0
        %v1083 = vmul.f32 %v987, %v730
        %v1084 = vmul.f32 %v988, %v731
        %v1085 = vmul.f32 %v989, %v732
        %v1086 = vmul.f32 %v990, %v733
        %v1087 = vmul.f32 %v991, %v734
        %v1088 = vmul.f32 %v992, %v735
        %v1089 = vmul.f32 %v993, %v736
        %v1090 = vmul.f32 %v994, %v737
        %v1091 = vmul.f32 %v995, %v738
        %v1092 = vmul.f32 %v996, %v739
        %v1093 = vmul.f32 %v997, %v740
        %v1094 = vmul.f32 %v998, %v741
        %v1095 = vmul.f32 %v999, %v742
        %v1096 = vmul.f32 %v1000, %v743
        %v1097 = vmul.f32 %v1001, %v744
        %v1098 = vmul.f32 %v1002, %v745
        %v1099 = vmul.f32 %v1003, %v746
        %v1100 = vmul.f32 %v1004, %v747
        %v1101 = vmul.f32 %v1005, %v748
        %v1102 = vmul.f32 %v1006, %v749
        %v1103 = vmul.f32 %v1007, %v750
        %v1104 = vmul.f32 %v1008, %v751
        %v1105 = vmul.f32 %v1009, %v752
        %v1106 = vmul.f32 %v1010, %v753
        %v1107 = vmul.f32 %v1011, %v754
        %v1108 = vmul.f32 %v1012, %v755
        %v1109 = vmul.f32 %v1013, %v756
        %v1110 = vmul.f32 %v1014, %v757
        %v1111 = vmul.f32 %v1015, %v758
        %v1112 = vmul.f32 %v1016, %v759
        %v1113 = vmul.f32 %v1017, %v760
        %v1114 = vmul.f32 %v1018, %v761
        %v1115 = vadd.f32 %v1083, %v1099
        %v1116 = vadd.f32 %v1084, %v1100
        %v1117 = vadd.f32 %v1085, %v1101
        %v1118 = vadd.f32 %v1086, %v1102
        %v1119 = vadd.f32 %v1087, %v1103
        %v1120 = vadd.f32 %v1088, %v1104
        %v1121 = vadd.f32 %v1089, %v1105
        %v1122 = vadd.f32 %v1090, %v1106
        %v1123 = vadd.f32 %v1091, %v1107
        %v1124 = vadd.f32 %v1092, %v1108
        %v1125 = vadd.f32 %v1093, %v1109
        %v1126 = vadd.f32 %v1094, %v1110
        %v1127 = vadd.f32 %v1095, %v1111
        %v1128 = vadd.f32 %v1096, %v1112
        %v1129 = vadd.f32 %v1097, %v1113
        %v1130 = vadd.f32 %v1098, %v1114
        %v1131 = vmul.f32 %v1115, 0.0078125
        %v1132 = vmul.f32 %v1116, 0.0078125
        %v1133 = vmul.f32 %v1117, 0.0078125
        %v1134 = vmul.f32 %v1118, 0.0078125
        %v1135 = vmul.f32 %v1119, 0.0078125
        %v1136 = vmul.f32 %v1120, 0.0078125
        %v1137 = vmul.f32 %v1121, 0.0078125
        %v1138 = vmul.f32 %v1122, 0.0078125
        %v1139 = vmul.f32 %v1123, 0.0078125
        %v1140 = vmul.f32 %v1124, 0.0078125
        %v1141 = vmul.f32 %v1125, 0.0078125
        %v1142 = vmul.f32 %v1126, 0.0078125
        %v1143 = vmul.f32 %v1127, 0.0078125
        %v1144 = vmul.f32 %v1128, 0.0078125
        %v1145 = vmul.f32 %v1129, 0.0078125
        %v1146 = vmul.f32 %v1130, 0.0078125
        %v1147 = vmul.f32 %v1051, %v667
        %v1148 = vmul.f32 %v1052, %v669
        %v1149 = vmul.f32 %v1053, %v671
        %v1150 = vmul.f32 %v1054, %v673
        %v1151 = vmul.f32 %v1055, %v675
        %v1152 = vmul.f32 %v1056, %v677
        %v1153 = vmul.f32 %v1057, %v679
        %v1154 = vmul.f32 %v1058, %v681
        %v1155 = vmul.f32 %v1059, %v683
        %v1156 = vmul.f32 %v1060, %v685
        %v1157 = vmul.f32 %v1061, %v687
        %v1158 = vmul.f32 %v1062, %v689
        %v1159 = vmul.f32 %v1063, %v691
        %v1160 = vmul.f32 %v1064, %v693
        %v1161 = vmul.f32 %v1065, %v695
        %v1162 = vmul.f32 %v1066, %v697
        %v1163 = vmul.f32 %v1067, %v699
        %v1164 = vmul.f32 %v1068, %v701
        %v1165 = vmul.f32 %v1069, %v703
        %v1166 = vmul.f32 %v1070, %v705
        %v1167 = vmul.f32 %v1071, %v707
        %v1168 = vmul.f32 %v1072, %v709
        %v1169 = vmul.f32 %v1073, %v711
        %v1170 = vmul.f32 %v1074, %v713
        %v1171 = vmul.f32 %v1075, %v715
        %v1172 = vmul.f32 %v1076, %v717
        %v1173 = vmul.f32 %v1077, %v719
        %v1174 = vmul.f32 %v1078, %v721
        %v1175 = vmul.f32 %v1079, %v723
        %v1176 = vmul.f32 %v1080, %v725
        %v1177 = vmul.f32 %v1081, %v727
        %v1178 = vmul.f32 %v1082, %v729
        %v1179 = vadd.f32 %v1147, %v1163
        %v1180 = vadd.f32 %v1148, %v1164
        %v1181 = vadd.f32 %v1149, %v1165
        %v1182 = vadd.f32 %v1150, %v1166
        %v1183 = vadd.f32 %v1151, %v1167
        %v1184 = vadd.f32 %v1152, %v1168
        %v1185 = vadd.f32 %v1153, %v1169
        %v1186 = vadd.f32 %v1154, %v1170
        %v1187 = vadd.f32 %v1155, %v1171
        %v1188 = vadd.f32 %v1156, %v1172
        %v1189 = vadd.f32 %v1157, %v1173
        %v1190 = vadd.f32 %v1158, %v1174
        %v1191 = vadd.f32 %v1159, %v1175
        %v1192 = vadd.f32 %v1160, %v1176
        %v1193 = vadd.f32 %v1161, %v1177
        %v1194 = vadd.f32 %v1162, %v1178
        %v1195 = vmul.f32 %v1179, 0.0078125
        %v1196 = vmul.f32 %v1180, 0.0078125
        %v1197 = vmul.f32 %v1181, 0.0078125
        %v1198 = vmul.f32 %v1182, 0.0078125
        %v1199 = vmul.f32 %v1183, 0.0078125
        %v1200 = vmul.f32 %v1184, 0.0078125
        %v1201 = vmul.f32 %v1185, 0.0078125
        %v1202 = vmul.f32 %v1186, 0.0078125
        %v1203 = vmul.f32 %v1187, 0.0078125
        %v1204 = vmul.f32 %v1188, 0.0078125
        %v1205 = vmul.f32 %v1189, 0.0078125
        %v1206 = vmul.f32 %v1190, 0.0078125
        %v1207 = vmul.f32 %v1191, 0.0078125
        %v1208 = vmul.f32 %v1192, 0.0078125
        %v1209 = vmul.f32 %v1193, 0.0078125
        %v1210 = vmul.f32 %v1194, 0.0078125
        %v1211 = vmul.f32 %v987, %v987
        %v1212 = vmul.f32 %v988, %v988
        %v1213 = vmul.f32 %v989, %v989
        %v1214 = vmul.f32 %v990, %v990
        %v1215 = vmul.f32 %v991, %v991
        %v1216 = vmul.f32 %v992, %v992
        %v1217 = vmul.f32 %v993, %v993
        %v1218 = vmul.f32 %v994, %v994
        %v1219 = vmul.f32 %v995, %v995
        %v1220 = vmul.f32 %v996, %v996
        %v1221 = vmul.f32 %v997, %v997
        %v1222 = vmul.f32 %v998, %v998
        %v1223 = vmul.f32 %v999, %v999
        %v1224 = vmul.f32 %v1000, %v1000
        %v1225 = vmul.f32 %v1001, %v1001
        %v1226 = vmul.f32 %v1002, %v1002
        %v1227 = vmul.f32 %v1003, %v1003
        %v1228 = vmul.f32 %v1004, %v1004
        %v1229 = vmul.f32 %v1005, %v1005
        %v1230 = vmul.f32 %v1006, %v1006
        %v1231 = vmul.f32 %v1007, %v1007
        %v1232 = vmul.f32 %v1008, %v1008
        %v1233 = vmul.f32 %v1009, %v1009
        %v1234 = vmul.f32 %v1010, %v1010
        %v1235 = vmul.f32 %v1011, %v1011
        %v1236 = vmul.f32 %v1012, %v1012
        %v1237 = vmul.f32 %v1013, %v1013
        %v1238 = vmul.f32 %v1014, %v1014
        %v1239 = vmul.f32 %v1015, %v1015
        %v1240 = vmul.f32 %v1016, %v1016
        %v1241 = vmul.f32 %v1017, %v1017
        %v1242 = vmul.f32 %v1018, %v1018
        %v1243 = vmul.f32 %v1211, %v922
        %v1244 = vmul.f32 %v1212, %v923
        %v1245 = vmul.f32 %v1213, %v924
        %v1246 = vmul.f32 %v1214, %v925
        %v1247 = vmul.f32 %v1215, %v926
        %v1248 = vmul.f32 %v1216, %v927
        %v1249 = vmul.f32 %v1217, %v928
        %v1250 = vmul.f32 %v1218, %v929
        %v1251 = vmul.f32 %v1219, %v930
        %v1252 = vmul.f32 %v1220, %v931
        %v1253 = vmul.f32 %v1221, %v932
        %v1254 = vmul.f32 %v1222, %v933
        %v1255 = vmul.f32 %v1223, %v934
        %v1256 = vmul.f32 %v1224, %v935
        %v1257 = vmul.f32 %v1225, %v936
        %v1258 = vmul.f32 %v1226, %v937
        %v1259 = vmul.f32 %v1227, %v938
        %v1260 = vmul.f32 %v1228, %v939
        %v1261 = vmul.f32 %v1229, %v940
        %v1262 = vmul.f32 %v1230, %v941
        %v1263 = vmul.f32 %v1231, %v942
        %v1264 = vmul.f32 %v1232, %v943
        %v1265 = vmul.f32 %v1233, %v944
        %v1266 = vmul.f32 %v1234, %v945
        %v1267 = vmul.f32 %v1235, %v946
        %v1268 = vmul.f32 %v1236, %v947
        %v1269 = vmul.f32 %v1237, %v948
        %v1270 = vmul.f32 %v1238, %v949
        %v1271 = vmul.f32 %v1239, %v950
        %v1272 = vmul.f32 %v1240, %v951
        %v1273 = vmul.f32 %v1241, %v952
        %v1274 = vmul.f32 %v1242, %v953
        %v1275 = vadd.f32 %v1243, %v1259
        %v1276 = vadd.f32 %v1244, %v1260
        %v1277 = vadd.f32 %v1245, %v1261
        %v1278 = vadd.f32 %v1246, %v1262
        %v1279 = vadd.f32 %v1247, %v1263
        %v1280 = vadd.f32 %v1248, %v1264
        %v1281 = vadd.f32 %v1249, %v1265
        %v1282 = vadd.f32 %v1250, %v1266
        %v1283 = vadd.f32 %v1251, %v1267
        %v1284 = vadd.f32 %v1252, %v1268
        %v1285 = vadd.f32 %v1253, %v1269
        %v1286 = vadd.f32 %v1254, %v1270
        %v1287 = vadd.f32 %v1255, %v1271
        %v1288 = vadd.f32 %v1256, %v1272
        %v1289 = vadd.f32 %v1257, %v1273
        %v1290 = vadd.f32 %v1258, %v1274
        %v1291 = vmul.f32 %v1275, 0.0078125
        %v1292 = vmul.f32 %v1276, 0.0078125
        %v1293 = vmul.f32 %v1277, 0.0078125
        %v1294 = vmul.f32 %v1278, 0.0078125
        %v1295 = vmul.f32 %v1279, 0.0078125
        %v1296 = vmul.f32 %v1280, 0.0078125
        %v1297 = vmul.f32 %v1281, 0.0078125
        %v1298 = vmul.f32 %v1282, 0.0078125
        %v1299 = vmul.f32 %v1283, 0.0078125
        %v1300 = vmul.f32 %v1284, 0.0078125
        %v1301 = vmul.f32 %v1285, 0.0078125
        %v1302 = vmul.f32 %v1286, 0.0078125
        %v1303 = vmul.f32 %v1287, 0.0078125
        %v1304 = vmul.f32 %v1288, 0.0078125
        %v1305 = vmul.f32 %v1289, 0.0078125
        %v1306 = vmul.f32 %v1290, 0.0078125
        %v1307 = vmul.f32 %v1051, %v1051
        %v1308 = vmul.f32 %v1052, %v1052
        %v1309 = vmul.f32 %v1053, %v1053
        %v1310 = vmul.f32 %v1054, %v1054
        %v1311 = vmul.f32 %v1055, %v1055
        %v1312 = vmul.f32 %v1056, %v1056
        %v1313 = vmul.f32 %v1057, %v1057
        %v1314 = vmul.f32 %v1058, %v1058
        %v1315 = vmul.f32 %v1059, %v1059
        %v1316 = vmul.f32 %v1060, %v1060
        %v1317 = vmul.f32 %v1061, %v1061
        %v1318 = vmul.f32 %v1062, %v1062
        %v1319 = vmul.f32 %v1063, %v1063
        %v1320 = vmul.f32 %v1064, %v1064
        %v1321 = vmul.f32 %v1065, %v1065
        %v1322 = vmul.f32 %v1066, %v1066
        %v1323 = vmul.f32 %v1067, %v1067
        %v1324 = vmul.f32 %v1068, %v1068
        %v1325 = vmul.f32 %v1069, %v1069
        %v1326 = vmul.f32 %v1070, %v1070
        %v1327 = vmul.f32 %v1071, %v1071
        %v1328 = vmul.f32 %v1072, %v1072
        %v1329 = vmul.f32 %v1073, %v1073
        %v1330 = vmul.f32 %v1074, %v1074
        %v1331 = vmul.f32 %v1075, %v1075
        %v1332 = vmul.f32 %v1076, %v1076
        %v1333 = vmul.f32 %v1077, %v1077
        %v1334 = vmul.f32 %v1078, %v1078
        %v1335 = vmul.f32 %v1079, %v1079
        %v1336 = vmul.f32 %v1080, %v1080
        %v1337 = vmul.f32 %v1081, %v1081
        %v1338 = vmul.f32 %v1082, %v1082
        %v1339 = vmul.f32 %v1307, %v859
        %v1340 = vmul.f32 %v1308, %v861
        %v1341 = vmul.f32 %v1309, %v863
        %v1342 = vmul.f32 %v1310, %v865
        %v1343 = vmul.f32 %v1311, %v867
        %v1344 = vmul.f32 %v1312, %v869
        %v1345 = vmul.f32 %v1313, %v871
        %v1346 = vmul.f32 %v1314, %v873
        %v1347 = vmul.f32 %v1315, %v875
        %v1348 = vmul.f32 %v1316, %v877
        %v1349 = vmul.f32 %v1317, %v879
        %v1350 = vmul.f32 %v1318, %v881
        %v1351 = vmul.f32 %v1319, %v883
        %v1352 = vmul.f32 %v1320, %v885
        %v1353 = vmul.f32 %v1321, %v887
        %v1354 = vmul.f32 %v1322, %v889
        %v1355 = vmul.f32 %v1323, %v891
        %v1356 = vmul.f32 %v1324, %v893
        %v1357 = vmul.f32 %v1325, %v895
        %v1358 = vmul.f32 %v1326, %v897
        %v1359 = vmul.f32 %v1327, %v899
        %v1360 = vmul.f32 %v1328, %v901
        %v1361 = vmul.f32 %v1329, %v903
        %v1362 = vmul.f32 %v1330, %v905
        %v1363 = vmul.f32 %v1331, %v907
        %v1364 = vmul.f32 %v1332, %v909
        %v1365 = vmul.f32 %v1333, %v911
        %v1366 = vmul.f32 %v1334, %v913
        %v1367 = vmul.f32 %v1335, %v915
        %v1368 = vmul.f32 %v1336, %v917
        %v1369 = vmul.f32 %v1337, %v919
        %v1370 = vmul.f32 %v1338, %v921
        %v1371 = vadd.f32 %v1339, %v1355
        %v1372 = vadd.f32 %v1340, %v1356
        %v1373 = vadd.f32 %v1341, %v1357
        %v1374 = vadd.f32 %v1342, %v1358
        %v1375 = vadd.f32 %v1343, %v1359
        %v1376 = vadd.f32 %v1344, %v1360
        %v1377 = vadd.f32 %v1345, %v1361
        %v1378 = vadd.f32 %v1346, %v1362
        %v1379 = vadd.f32 %v1347, %v1363
        %v1380 = vadd.f32 %v1348, %v1364
        %v1381 = vadd.f32 %v1349, %v1365
        %v1382 = vadd.f32 %v1350, %v1366
        %v1383 = vadd.f32 %v1351, %v1367
        %v1384 = vadd.f32 %v1352, %v1368
        %v1385 = vadd.f32 %v1353, %v1369
        %v1386 = vadd.f32 %v1354, %v1370
        %v1387 = vmul.f32 %v1371, 0.0078125
        %v1388 = vmul.f32 %v1372, 0.0078125
        %v1389 = vmul.f32 %v1373, 0.0078125
        %v1390 = vmul.f32 %v1374, 0.0078125
        %v1391 = vmul.f32 %v1375, 0.0078125
        %v1392 = vmul.f32 %v1376, 0.0078125
        %v1393 = vmul.f32 %v1377, 0.0078125
        %v1394 = vmul.f32 %v1378, 0.0078125
        %v1395 = vmul.f32 %v1379, 0.0078125
        %v1396 = vmul.f32 %v1380, 0.0078125
        %v1397 = vmul.f32 %v1381, 0.0078125
        %v1398 = vmul.f32 %v1382, 0.0078125
        %v1399 = vmul.f32 %v1383, 0.0078125
        %v1400 = vmul.f32 %v1384, 0.0078125
        %v1401 = vmul.f32 %v1385, 0.0078125
        %v1402 = vmul.f32 %v1386, 0.0078125
        %v1403 = vmul.f32 %v1131, %v1131
        %v1404 = vmul.f32 %v1132, %v1132
        %v1405 = vmul.f32 %v1133, %v1133
        %v1406 = vmul.f32 %v1134, %v1134
        %v1407 = vmul.f32 %v1135, %v1135
        %v1408 = vmul.f32 %v1136, %v1136
        %v1409 = vmul.f32 %v1137, %v1137
        %v1410 = vmul.f32 %v1138, %v1138
        %v1411 = vmul.f32 %v1139, %v1139
        %v1412 = vmul.f32 %v1140, %v1140
        %v1413 = vmul.f32 %v1141, %v1141
        %v1414 = vmul.f32 %v1142, %v1142
        %v1415 = vmul.f32 %v1143, %v1143
        %v1416 = vmul.f32 %v1144, %v1144
        %v1417 = vmul.f32 %v1145, %v1145
        %v1418 = vmul.f32 %v1146, %v1146
        %v1419 = vsub.f32 %v1291, %v1403
        %v1420 = vsub.f32 %v1292, %v1404
        %v1421 = vsub.f32 %v1293, %v1405
        %v1422 = vsub.f32 %v1294, %v1406
        %v1423 = vsub.f32 %v1295, %v1407
        %v1424 = vsub.f32 %v1296, %v1408
        %v1425 = vsub.f32 %v1297, %v1409
        %v1426 = vsub.f32 %v1298, %v1410
        %v1427 = vsub.f32 %v1299, %v1411
        %v1428 = vsub.f32 %v1300, %v1412
        %v1429 = vsub.f32 %v1301, %v1413
        %v1430 = vsub.f32 %v1302, %v1414
        %v1431 = vsub.f32 %v1303, %v1415
        %v1432 = vsub.f32 %v1304, %v1416
        %v1433 = vsub.f32 %v1305, %v1417
        %v1434 = vsub.f32 %v1306, %v1418
        %v1435 = vmul.f32 %v1195, %v1195
        %v1436 = vmul.f32 %v1196, %v1196
        %v1437 = vmul.f32 %v1197, %v1197
        %v1438 = vmul.f32 %v1198, %v1198
        %v1439 = vmul.f32 %v1199, %v1199
        %v1440 = vmul.f32 %v1200, %v1200
        %v1441 = vmul.f32 %v1201, %v1201
        %v1442 = vmul.f32 %v1202, %v1202
        %v1443 = vmul.f32 %v1203, %v1203
        %v1444 = vmul.f32 %v1204, %v1204
        %v1445 = vmul.f32 %v1205, %v1205
        %v1446 = vmul.f32 %v1206, %v1206
        %v1447 = vmul.f32 %v1207, %v1207
        %v1448 = vmul.f32 %v1208, %v1208
        %v1449 = vmul.f32 %v1209, %v1209
        %v1450 = vmul.f32 %v1210, %v1210
        %v1451 = vsub.f32 %v1387, %v1435
        %v1452 = vsub.f32 %v1388, %v1436
        %v1453 = vsub.f32 %v1389, %v1437
        %v1454 = vsub.f32 %v1390, %v1438
        %v1455 = vsub.f32 %v1391, %v1439
        %v1456 = vsub.f32 %v1392, %v1440
        %v1457 = vsub.f32 %v1393, %v1441
        %v1458 = vsub.f32 %v1394, %v1442
        %v1459 = vsub.f32 %v1395, %v1443
        %v1460 = vsub.f32 %v1396, %v1444
        %v1461 = vsub.f32 %v1397, %v1445
        %v1462 = vsub.f32 %v1398, %v1446
        %v1463 = vsub.f32 %v1399, %v1447
        %v1464 = vsub.f32 %v1400, %v1448
        %v1465 = vsub.f32 %v1401, %v1449
        %v1466 = vsub.f32 %v1402, %v1450
        %v1467 = vld [vmem:[%s263] sm:$0xff]
        %v1468 = vld [vmem:[%s263 + $0x8] sm:$0xff]
        %v1469 = vld [vmem:[%s263 + $0x10] sm:$0xff]
        %v1470 = vld [vmem:[%s263 + $0x18] sm:$0xff]
        %v1471 = vld [vmem:[%s263 + $0x20] sm:$0xff]
        %v1472 = vld [vmem:[%s263 + $0x28] sm:$0xff]
        %v1473 = vld [vmem:[%s263 + $0x30] sm:$0xff]
        %v1474 = vld [vmem:[%s263 + $0x38] sm:$0xff]
        %v1475 = vld [vmem:[%s263 + $0x40] sm:$0xff]
        %v1476 = vld [vmem:[%s263 + $0x48] sm:$0xff]
        %v1477 = vld [vmem:[%s263 + $0x50] sm:$0xff]
        %v1478 = vld [vmem:[%s263 + $0x58] sm:$0xff]
        %v1479 = vld [vmem:[%s263 + $0x60] sm:$0xff]
        %v1480 = vld [vmem:[%s263 + $0x68] sm:$0xff]
        %v1481 = vld [vmem:[%s263 + $0x70] sm:$0xff]
        %v1482 = vld [vmem:[%s263 + $0x78] sm:$0xff]
        %v1483 = vadd.f32 %v1419, 1e-05
        %v1484 = vadd.f32 %v1420, 1e-05
        %v1485 = vadd.f32 %v1421, 1e-05
        %v1486 = vadd.f32 %v1422, 1e-05
        %v1487 = vadd.f32 %v1423, 1e-05
        %v1488 = vadd.f32 %v1424, 1e-05
        %v1489 = vadd.f32 %v1425, 1e-05
        %v1490 = vadd.f32 %v1426, 1e-05
        %v1491 = vadd.f32 %v1427, 1e-05
        %v1492 = vadd.f32 %v1428, 1e-05
        %v1493 = vadd.f32 %v1429, 1e-05
        %v1494 = vadd.f32 %v1430, 1e-05
        %v1495 = vadd.f32 %v1431, 1e-05
        %v1496 = vadd.f32 %v1432, 1e-05
        %v1497 = vadd.f32 %v1433, 1e-05
        %v1498 = vadd.f32 %v1434, 1e-05
        %v1499 = vrsqrt.pop %v1483
        %v1500 = vrsqrt.pop %v1484
        %v1501 = vrsqrt.pop %v1485
        %v1502 = vrsqrt.pop %v1486
        %v1503 = vrsqrt.pop %v1487
        %v1504 = vrsqrt.pop %v1488
        %v1505 = vrsqrt.pop %v1489
        %v1506 = vrsqrt.pop %v1490
        %v1507 = vrsqrt.pop %v1491
        %v1508 = vrsqrt.pop %v1492
        %v1509 = vrsqrt.pop %v1493
        %v1510 = vrsqrt.pop %v1494
        %v1511 = vrsqrt.pop %v1495
        %v1512 = vrsqrt.pop %v1496
        %v1513 = vrsqrt.pop %v1497
        %v1514 = vrsqrt.pop %v1498
        %v1515 = vmul.f32 %v1467, %v1499
        %v1516 = vmul.f32 %v1468, %v1500
        %v1517 = vmul.f32 %v1469, %v1501
        %v1518 = vmul.f32 %v1470, %v1502
        %v1519 = vmul.f32 %v1471, %v1503
        %v1520 = vmul.f32 %v1472, %v1504
        %v1521 = vmul.f32 %v1473, %v1505
        %v1522 = vmul.f32 %v1474, %v1506
        %v1523 = vmul.f32 %v1475, %v1507
        %v1524 = vmul.f32 %v1476, %v1508
        %v1525 = vmul.f32 %v1477, %v1509
        %v1526 = vmul.f32 %v1478, %v1510
        %v1527 = vmul.f32 %v1479, %v1511
        %v1528 = vmul.f32 %v1480, %v1512
        %v1529 = vmul.f32 %v1481, %v1513
        %v1530 = vmul.f32 %v1482, %v1514
        %v1531 = vadd.f32 %v1451, 1e-05
        %v1532 = vadd.f32 %v1452, 1e-05
        %v1533 = vadd.f32 %v1453, 1e-05
        %v1534 = vadd.f32 %v1454, 1e-05
        %v1535 = vadd.f32 %v1455, 1e-05
        %v1536 = vadd.f32 %v1456, 1e-05
        %v1537 = vadd.f32 %v1457, 1e-05
        %v1538 = vadd.f32 %v1458, 1e-05
        %v1539 = vadd.f32 %v1459, 1e-05
        %v1540 = vadd.f32 %v1460, 1e-05
        %v1541 = vadd.f32 %v1461, 1e-05
        %v1542 = vadd.f32 %v1462, 1e-05
        %v1543 = vadd.f32 %v1463, 1e-05
        %v1544 = vadd.f32 %v1464, 1e-05
        %v1545 = vadd.f32 %v1465, 1e-05
        %v1546 = vadd.f32 %v1466, 1e-05
        %v1547 = vrsqrt.pop %v1531
        %v1548 = vrsqrt.pop %v1532
        %v1549 = vrsqrt.pop %v1533
        %v1550 = vrsqrt.pop %v1534
        %v1551 = vrsqrt.pop %v1535
        %v1552 = vrsqrt.pop %v1536
        %v1553 = vrsqrt.pop %v1537
        %v1554 = vrsqrt.pop %v1538
        %v1555 = vrsqrt.pop %v1539
        %v1556 = vrsqrt.pop %v1540
        %v1557 = vrsqrt.pop %v1541
        %v1558 = vrsqrt.pop %v1542
        %v1559 = vrsqrt.pop %v1543
        %v1560 = vrsqrt.pop %v1544
        %v1561 = vrsqrt.pop %v1545
        %v1562 = vrsqrt.pop %v1546
        %v1563 = vmul.f32 %v1467, %v1547
        %v1564 = vmul.f32 %v1468, %v1548
        %v1565 = vmul.f32 %v1469, %v1549
        %v1566 = vmul.f32 %v1470, %v1550
        %v1567 = vmul.f32 %v1471, %v1551
        %v1568 = vmul.f32 %v1472, %v1552
        %v1569 = vmul.f32 %v1473, %v1553
        %v1570 = vmul.f32 %v1474, %v1554
        %v1571 = vmul.f32 %v1475, %v1555
        %v1572 = vmul.f32 %v1476, %v1556
        %v1573 = vmul.f32 %v1477, %v1557
        %v1574 = vmul.f32 %v1478, %v1558
        %v1575 = vmul.f32 %v1479, %v1559
        %v1576 = vmul.f32 %v1480, %v1560
        %v1577 = vmul.f32 %v1481, %v1561
        %v1578 = vmul.f32 %v1482, %v1562
        %v1579 = vmul.f32 %v1131, %v1515
        %v1580 = vmul.f32 %v1132, %v1516
        %v1581 = vmul.f32 %v1133, %v1517
        %v1582 = vmul.f32 %v1134, %v1518
        %v1583 = vmul.f32 %v1135, %v1519
        %v1584 = vmul.f32 %v1136, %v1520
        %v1585 = vmul.f32 %v1137, %v1521
        %v1586 = vmul.f32 %v1138, %v1522
        %v1587 = vmul.f32 %v1139, %v1523
        %v1588 = vmul.f32 %v1140, %v1524
        %v1589 = vmul.f32 %v1141, %v1525
        %v1590 = vmul.f32 %v1142, %v1526
        %v1591 = vmul.f32 %v1143, %v1527
        %v1592 = vmul.f32 %v1144, %v1528
        %v1593 = vmul.f32 %v1145, %v1529
        %v1594 = vmul.f32 %v1146, %v1530
        %1611 = vrot.lane.b32.xlu0 %v1579, 2
        %v1612 = vpop.permute.xlu0 %1611
        %1613 = vrot.lane.b32.xlu0 %v1580, 2
        %v1614 = vpop.permute.xlu0 %1613
        %1615 = vrot.lane.b32.xlu0 %v1581, 2
        %v1616 = vpop.permute.xlu0 %1615
        %1617 = vrot.lane.b32.xlu0 %v1582, 2
        %v1618 = vpop.permute.xlu0 %1617
        %1619 = vrot.lane.b32.xlu0 %v1583, 2
        %v1620 = vpop.permute.xlu0 %1619
        %1621 = vrot.lane.b32.xlu0 %v1584, 2
        %v1622 = vpop.permute.xlu0 %1621
        %1623 = vrot.lane.b32.xlu0 %v1585, 2
        %v1624 = vpop.permute.xlu0 %1623
        %1625 = vrot.lane.b32.xlu0 %v1586, 2
        %v1626 = vpop.permute.xlu0 %1625
        %1627 = vrot.lane.b32.xlu0 %v1587, 2
        %v1628 = vpop.permute.xlu0 %1627
        %1629 = vrot.lane.b32.xlu0 %v1588, 2
        %v1630 = vpop.permute.xlu0 %1629
        %1631 = vrot.lane.b32.xlu0 %v1589, 2
        %v1632 = vpop.permute.xlu0 %1631
        %1633 = vrot.lane.b32.xlu0 %v1590, 2
        %v1634 = vpop.permute.xlu0 %1633
        %1635 = vrot.lane.b32.xlu0 %v1591, 2
        %v1636 = vpop.permute.xlu0 %1635
        %1637 = vrot.lane.b32.xlu0 %v1592, 2
        %v1638 = vpop.permute.xlu0 %1637
        %1639 = vrot.lane.b32.xlu0 %v1593, 2
        %v1640 = vpop.permute.xlu0 %1639
        %1641 = vrot.lane.b32.xlu0 %v1594, 2
        %v1642 = vpop.permute.xlu0 %1641
        %v1659 = vsub.f32 %v1467, %v1612
        %v1660 = vsub.f32 %v1468, %v1614
        %v1661 = vsub.f32 %v1469, %v1616
        %v1662 = vsub.f32 %v1470, %v1618
        %v1663 = vsub.f32 %v1471, %v1620
        %v1664 = vsub.f32 %v1472, %v1622
        %v1665 = vsub.f32 %v1473, %v1624
        %v1666 = vsub.f32 %v1474, %v1626
        %v1667 = vsub.f32 %v1475, %v1628
        %v1668 = vsub.f32 %v1476, %v1630
        %v1669 = vsub.f32 %v1477, %v1632
        %v1670 = vsub.f32 %v1478, %v1634
        %v1671 = vsub.f32 %v1479, %v1636
        %v1672 = vsub.f32 %v1480, %v1638
        %v1673 = vsub.f32 %v1481, %v1640
        %v1674 = vsub.f32 %v1482, %v1642
        %v1675 = vmul.f32 %v1195, %v1563
        %v1676 = vmul.f32 %v1196, %v1564
        %v1677 = vmul.f32 %v1197, %v1565
        %v1678 = vmul.f32 %v1198, %v1566
        %v1679 = vmul.f32 %v1199, %v1567
        %v1680 = vmul.f32 %v1200, %v1568
        %v1681 = vmul.f32 %v1201, %v1569
        %v1682 = vmul.f32 %v1202, %v1570
        %v1683 = vmul.f32 %v1203, %v1571
        %v1684 = vmul.f32 %v1204, %v1572
        %v1685 = vmul.f32 %v1205, %v1573
        %v1686 = vmul.f32 %v1206, %v1574
        %v1687 = vmul.f32 %v1207, %v1575
        %v1688 = vmul.f32 %v1208, %v1576
        %v1689 = vmul.f32 %v1209, %v1577
        %v1690 = vmul.f32 %v1210, %v1578
        %1707 = vrot.lane.b32.xlu0 %v1675, 2
        %v1708 = vpop.permute.xlu0 %1707
        %1709 = vrot.lane.b32.xlu0 %v1676, 2
        %v1710 = vpop.permute.xlu0 %1709
        %1711 = vrot.lane.b32.xlu0 %v1677, 2
        %v1712 = vpop.permute.xlu0 %1711
        %1713 = vrot.lane.b32.xlu0 %v1678, 2
        %v1714 = vpop.permute.xlu0 %1713
        %1715 = vrot.lane.b32.xlu0 %v1679, 2
        %v1716 = vpop.permute.xlu0 %1715
        %1717 = vrot.lane.b32.xlu0 %v1680, 2
        %v1718 = vpop.permute.xlu0 %1717
        %1719 = vrot.lane.b32.xlu0 %v1681, 2
        %v1720 = vpop.permute.xlu0 %1719
        %1721 = vrot.lane.b32.xlu0 %v1682, 2
        %v1722 = vpop.permute.xlu0 %1721
        %1723 = vrot.lane.b32.xlu0 %v1683, 2
        %v1724 = vpop.permute.xlu0 %1723
        %1725 = vrot.lane.b32.xlu0 %v1684, 2
        %v1726 = vpop.permute.xlu0 %1725
        %1727 = vrot.lane.b32.xlu0 %v1685, 2
        %v1728 = vpop.permute.xlu0 %1727
        %1729 = vrot.lane.b32.xlu0 %v1686, 2
        %v1730 = vpop.permute.xlu0 %1729
        %1731 = vrot.lane.b32.xlu0 %v1687, 2
        %v1732 = vpop.permute.xlu0 %1731
        %1733 = vrot.lane.b32.xlu0 %v1688, 2
        %v1734 = vpop.permute.xlu0 %1733
        %1735 = vrot.lane.b32.xlu0 %v1689, 2
        %v1736 = vpop.permute.xlu0 %1735
        %1737 = vrot.lane.b32.xlu0 %v1690, 2
        %v1738 = vpop.permute.xlu0 %1737
        %v1755 = vsub.f32 %v1467, %v1708
        %v1756 = vsub.f32 %v1468, %v1710
        %v1757 = vsub.f32 %v1469, %v1712
        %v1758 = vsub.f32 %v1470, %v1714
        %v1759 = vsub.f32 %v1471, %v1716
        %v1760 = vsub.f32 %v1472, %v1718
        %v1761 = vsub.f32 %v1473, %v1720
        %v1762 = vsub.f32 %v1474, %v1722
        %v1763 = vsub.f32 %v1475, %v1724
        %v1764 = vsub.f32 %v1476, %v1726
        %v1765 = vsub.f32 %v1477, %v1728
        %v1766 = vsub.f32 %v1478, %v1730
        %v1767 = vsub.f32 %v1479, %v1732
        %v1768 = vsub.f32 %v1480, %v1734
        %v1769 = vsub.f32 %v1481, %v1736
        %v1770 = vsub.f32 %v1482, %v1738
        %v1771 = vmul.f32 %v987, %v1515
        %v1772 = vmul.f32 %v988, %v1516
        %v1773 = vmul.f32 %v989, %v1517
        %v1774 = vmul.f32 %v990, %v1518
        %v1775 = vmul.f32 %v991, %v1519
        %v1776 = vmul.f32 %v992, %v1520
        %v1777 = vmul.f32 %v993, %v1521
        %v1778 = vmul.f32 %v994, %v1522
        %v1779 = vmul.f32 %v995, %v1523
        %v1780 = vmul.f32 %v996, %v1524
        %v1781 = vmul.f32 %v997, %v1525
        %v1782 = vmul.f32 %v998, %v1526
        %v1783 = vmul.f32 %v999, %v1527
        %v1784 = vmul.f32 %v1000, %v1528
        %v1785 = vmul.f32 %v1001, %v1529
        %v1786 = vmul.f32 %v1002, %v1530
        %v1787 = vmul.f32 %v1003, %v1515
        %v1788 = vmul.f32 %v1004, %v1516
        %v1789 = vmul.f32 %v1005, %v1517
        %v1790 = vmul.f32 %v1006, %v1518
        %v1791 = vmul.f32 %v1007, %v1519
        %v1792 = vmul.f32 %v1008, %v1520
        %v1793 = vmul.f32 %v1009, %v1521
        %v1794 = vmul.f32 %v1010, %v1522
        %v1795 = vmul.f32 %v1011, %v1523
        %v1796 = vmul.f32 %v1012, %v1524
        %v1797 = vmul.f32 %v1013, %v1525
        %v1798 = vmul.f32 %v1014, %v1526
        %v1799 = vmul.f32 %v1015, %v1527
        %v1800 = vmul.f32 %v1016, %v1528
        %v1801 = vmul.f32 %v1017, %v1529
        %v1802 = vmul.f32 %v1018, %v1530
        %v1803 = vmul.f32 %v1051, %v1563
        %v1804 = vmul.f32 %v1052, %v1564
        %v1805 = vmul.f32 %v1053, %v1565
        %v1806 = vmul.f32 %v1054, %v1566
        %v1807 = vmul.f32 %v1055, %v1567
        %v1808 = vmul.f32 %v1056, %v1568
        %v1809 = vmul.f32 %v1057, %v1569
        %v1810 = vmul.f32 %v1058, %v1570
        %v1811 = vmul.f32 %v1059, %v1571
        %v1812 = vmul.f32 %v1060, %v1572
        %v1813 = vmul.f32 %v1061, %v1573
        %v1814 = vmul.f32 %v1062, %v1574
        %v1815 = vmul.f32 %v1063, %v1575
        %v1816 = vmul.f32 %v1064, %v1576
        %v1817 = vmul.f32 %v1065, %v1577
        %v1818 = vmul.f32 %v1066, %v1578
        %v1819 = vmul.f32 %v1067, %v1563
        %v1820 = vmul.f32 %v1068, %v1564
        %v1821 = vmul.f32 %v1069, %v1565
        %v1822 = vmul.f32 %v1070, %v1566
        %v1823 = vmul.f32 %v1071, %v1567
        %v1824 = vmul.f32 %v1072, %v1568
        %v1825 = vmul.f32 %v1073, %v1569
        %v1826 = vmul.f32 %v1074, %v1570
        %v1827 = vmul.f32 %v1075, %v1571
        %v1828 = vmul.f32 %v1076, %v1572
        %v1829 = vmul.f32 %v1077, %v1573
        %v1830 = vmul.f32 %v1078, %v1574
        %v1831 = vmul.f32 %v1079, %v1575
        %v1832 = vmul.f32 %v1080, %v1576
        %v1833 = vmul.f32 %v1081, %v1577
        %v1834 = vmul.f32 %v1082, %v1578
        %1867 = vrot.lane.b32.xlu0 %v1771, 1
        %v1868 = vpop.permute.xlu0 %1867
        %1869 = vrot.lane.b32.xlu0 %v1772, 1
        %v1870 = vpop.permute.xlu0 %1869
        %1871 = vrot.lane.b32.xlu0 %v1773, 1
        %v1872 = vpop.permute.xlu0 %1871
        %1873 = vrot.lane.b32.xlu0 %v1774, 1
        %v1874 = vpop.permute.xlu0 %1873
        %1875 = vrot.lane.b32.xlu0 %v1775, 1
        %v1876 = vpop.permute.xlu0 %1875
        %1877 = vrot.lane.b32.xlu0 %v1776, 1
        %v1878 = vpop.permute.xlu0 %1877
        %1879 = vrot.lane.b32.xlu0 %v1777, 1
        %v1880 = vpop.permute.xlu0 %1879
        %1881 = vrot.lane.b32.xlu0 %v1778, 1
        %v1882 = vpop.permute.xlu0 %1881
        %1883 = vrot.lane.b32.xlu0 %v1779, 1
        %v1884 = vpop.permute.xlu0 %1883
        %1885 = vrot.lane.b32.xlu0 %v1780, 1
        %v1886 = vpop.permute.xlu0 %1885
        %1887 = vrot.lane.b32.xlu0 %v1781, 1
        %v1888 = vpop.permute.xlu0 %1887
        %1889 = vrot.lane.b32.xlu0 %v1782, 1
        %v1890 = vpop.permute.xlu0 %1889
        %1891 = vrot.lane.b32.xlu0 %v1783, 1
        %v1892 = vpop.permute.xlu0 %1891
        %1893 = vrot.lane.b32.xlu0 %v1784, 1
        %v1894 = vpop.permute.xlu0 %1893
        %1895 = vrot.lane.b32.xlu0 %v1785, 1
        %v1896 = vpop.permute.xlu0 %1895
        %1897 = vrot.lane.b32.xlu0 %v1786, 1
        %v1898 = vpop.permute.xlu0 %1897
        %1899 = vrot.lane.b32.xlu0 %v1787, 1
        %v1900 = vpop.permute.xlu0 %1899
        %1901 = vrot.lane.b32.xlu0 %v1788, 1
        %v1902 = vpop.permute.xlu0 %1901
        %1903 = vrot.lane.b32.xlu0 %v1789, 1
        %v1904 = vpop.permute.xlu0 %1903
        %1905 = vrot.lane.b32.xlu0 %v1790, 1
        %v1906 = vpop.permute.xlu0 %1905
        %1907 = vrot.lane.b32.xlu0 %v1791, 1
        %v1908 = vpop.permute.xlu0 %1907
        %1909 = vrot.lane.b32.xlu0 %v1792, 1
        %v1910 = vpop.permute.xlu0 %1909
        %1911 = vrot.lane.b32.xlu0 %v1793, 1
        %v1912 = vpop.permute.xlu0 %1911
        %1913 = vrot.lane.b32.xlu0 %v1794, 1
        %v1914 = vpop.permute.xlu0 %1913
        %1915 = vrot.lane.b32.xlu0 %v1795, 1
        %v1916 = vpop.permute.xlu0 %1915
        %1917 = vrot.lane.b32.xlu0 %v1796, 1
        %v1918 = vpop.permute.xlu0 %1917
        %1919 = vrot.lane.b32.xlu0 %v1797, 1
        %v1920 = vpop.permute.xlu0 %1919
        %1921 = vrot.lane.b32.xlu0 %v1798, 1
        %v1922 = vpop.permute.xlu0 %1921
        %1923 = vrot.lane.b32.xlu0 %v1799, 1
        %v1924 = vpop.permute.xlu0 %1923
        %1925 = vrot.lane.b32.xlu0 %v1800, 1
        %v1926 = vpop.permute.xlu0 %1925
        %1927 = vrot.lane.b32.xlu0 %v1801, 1
        %v1928 = vpop.permute.xlu0 %1927
        %1929 = vrot.lane.b32.xlu0 %v1802, 1
        %v1930 = vpop.permute.xlu0 %1929
        %v1963 = vsub.f32 %v1803, %v1868
        %v1964 = vsub.f32 %v1804, %v1870
        %v1965 = vsub.f32 %v1805, %v1872
        %v1966 = vsub.f32 %v1806, %v1874
        %v1967 = vsub.f32 %v1807, %v1876
        %v1968 = vsub.f32 %v1808, %v1878
        %v1969 = vsub.f32 %v1809, %v1880
        %v1970 = vsub.f32 %v1810, %v1882
        %v1971 = vsub.f32 %v1811, %v1884
        %v1972 = vsub.f32 %v1812, %v1886
        %v1973 = vsub.f32 %v1813, %v1888
        %v1974 = vsub.f32 %v1814, %v1890
        %v1975 = vsub.f32 %v1815, %v1892
        %v1976 = vsub.f32 %v1816, %v1894
        %v1977 = vsub.f32 %v1817, %v1896
        %v1978 = vsub.f32 %v1818, %v1898
        %v1979 = vsub.f32 %v1819, %v1900
        %v1980 = vsub.f32 %v1820, %v1902
        %v1981 = vsub.f32 %v1821, %v1904
        %v1982 = vsub.f32 %v1822, %v1906
        %v1983 = vsub.f32 %v1823, %v1908
        %v1984 = vsub.f32 %v1824, %v1910
        %v1985 = vsub.f32 %v1825, %v1912
        %v1986 = vsub.f32 %v1826, %v1914
        %v1987 = vsub.f32 %v1827, %v1916
        %v1988 = vsub.f32 %v1828, %v1918
        %v1989 = vsub.f32 %v1829, %v1920
        %v1990 = vsub.f32 %v1830, %v1922
        %v1991 = vsub.f32 %v1831, %v1924
        %v1992 = vsub.f32 %v1832, %v1926
        %v1993 = vsub.f32 %v1833, %v1928
        %v1994 = vsub.f32 %v1834, %v1930
        %1996 = vset.pattern.permute.xlu0 1
        %1997 = vperm.xlu0 %1996, %v1963
        %v1998 = vpop.permute.xlu0 %1997
        %2001 = vset.pattern.permute.xlu0 1
        %2002 = vperm.xlu0 %2001, %v1964
        %v2003 = vpop.permute.xlu0 %2002
        %2006 = vset.pattern.permute.xlu0 1
        %2007 = vperm.xlu0 %2006, %v1965
        %v2008 = vpop.permute.xlu0 %2007
        %2011 = vset.pattern.permute.xlu0 1
        %2012 = vperm.xlu0 %2011, %v1966
        %v2013 = vpop.permute.xlu0 %2012
        %2016 = vset.pattern.permute.xlu0 1
        %2017 = vperm.xlu0 %2016, %v1967
        %v2018 = vpop.permute.xlu0 %2017
        %2021 = vset.pattern.permute.xlu0 1
        %2022 = vperm.xlu0 %2021, %v1968
        %v2023 = vpop.permute.xlu0 %2022
        %2026 = vset.pattern.permute.xlu0 1
        %2027 = vperm.xlu0 %2026, %v1969
        %v2028 = vpop.permute.xlu0 %2027
        %2031 = vset.pattern.permute.xlu0 1
        %2032 = vperm.xlu0 %2031, %v1970
        %v2033 = vpop.permute.xlu0 %2032
        %2036 = vset.pattern.permute.xlu0 1
        %2037 = vperm.xlu0 %2036, %v1971
        %v2038 = vpop.permute.xlu0 %2037
        %2041 = vset.pattern.permute.xlu0 1
        %2042 = vperm.xlu0 %2041, %v1972
        %v2043 = vpop.permute.xlu0 %2042
        %2046 = vset.pattern.permute.xlu0 1
        %2047 = vperm.xlu0 %2046, %v1973
        %v2048 = vpop.permute.xlu0 %2047
        %2051 = vset.pattern.permute.xlu0 1
        %2052 = vperm.xlu0 %2051, %v1974
        %v2053 = vpop.permute.xlu0 %2052
        %2056 = vset.pattern.permute.xlu0 1
        %2057 = vperm.xlu0 %2056, %v1975
        %v2058 = vpop.permute.xlu0 %2057
        %2061 = vset.pattern.permute.xlu0 1
        %2062 = vperm.xlu0 %2061, %v1976
        %v2063 = vpop.permute.xlu0 %2062
        %2066 = vset.pattern.permute.xlu0 1
        %2067 = vperm.xlu0 %2066, %v1977
        %v2068 = vpop.permute.xlu0 %2067
        %2071 = vset.pattern.permute.xlu0 1
        %2072 = vperm.xlu0 %2071, %v1978
        %v2073 = vpop.permute.xlu0 %2072
        %2076 = vset.pattern.permute.xlu0 1
        %2077 = vperm.xlu0 %2076, %v1979
        %v2078 = vpop.permute.xlu0 %2077
        %2081 = vset.pattern.permute.xlu0 1
        %2082 = vperm.xlu0 %2081, %v1980
        %v2083 = vpop.permute.xlu0 %2082
        %2086 = vset.pattern.permute.xlu0 1
        %2087 = vperm.xlu0 %2086, %v1981
        %v2088 = vpop.permute.xlu0 %2087
        %2091 = vset.pattern.permute.xlu0 1
        %2092 = vperm.xlu0 %2091, %v1982
        %v2093 = vpop.permute.xlu0 %2092
        %2096 = vset.pattern.permute.xlu0 1
        %2097 = vperm.xlu0 %2096, %v1983
        %v2098 = vpop.permute.xlu0 %2097
        %2101 = vset.pattern.permute.xlu0 1
        %2102 = vperm.xlu0 %2101, %v1984
        %v2103 = vpop.permute.xlu0 %2102
        %2106 = vset.pattern.permute.xlu0 1
        %2107 = vperm.xlu0 %2106, %v1985
        %v2108 = vpop.permute.xlu0 %2107
        %2111 = vset.pattern.permute.xlu0 1
        %2112 = vperm.xlu0 %2111, %v1986
        %v2113 = vpop.permute.xlu0 %2112
        %2116 = vset.pattern.permute.xlu0 1
        %2117 = vperm.xlu0 %2116, %v1987
        %v2118 = vpop.permute.xlu0 %2117
        %2121 = vset.pattern.permute.xlu0 1
        %2122 = vperm.xlu0 %2121, %v1988
        %v2123 = vpop.permute.xlu0 %2122
        %2126 = vset.pattern.permute.xlu0 1
        %2127 = vperm.xlu0 %2126, %v1989
        %v2128 = vpop.permute.xlu0 %2127
        %2131 = vset.pattern.permute.xlu0 1
        %2132 = vperm.xlu0 %2131, %v1990
        %v2133 = vpop.permute.xlu0 %2132
        %2136 = vset.pattern.permute.xlu0 1
        %2137 = vperm.xlu0 %2136, %v1991
        %v2138 = vpop.permute.xlu0 %2137
        %2141 = vset.pattern.permute.xlu0 1
        %2142 = vperm.xlu0 %2141, %v1992
        %v2143 = vpop.permute.xlu0 %2142
        %2146 = vset.pattern.permute.xlu0 1
        %2147 = vperm.xlu0 %2146, %v1993
        %v2148 = vpop.permute.xlu0 %2147
        %2151 = vset.pattern.permute.xlu0 1
        %2152 = vperm.xlu0 %2151, %v1994
        %v2153 = vpop.permute.xlu0 %2152
        %v2155 = vmul.f32 %v1998, %v440
        %v2156 = vmul.f32 %v2003, %v440
        %v2157 = vmul.f32 %v2008, %v440
        %v2158 = vmul.f32 %v2013, %v440
        %v2159 = vmul.f32 %v2018, %v440
        %v2160 = vmul.f32 %v2023, %v440
        %v2161 = vmul.f32 %v2028, %v440
        %v2162 = vmul.f32 %v2033, %v440
        %v2163 = vmul.f32 %v2038, %v440
        %v2164 = vmul.f32 %v2043, %v440
        %v2165 = vmul.f32 %v2048, %v440
        %v2166 = vmul.f32 %v2053, %v440
        %v2167 = vmul.f32 %v2058, %v440
        %v2168 = vmul.f32 %v2063, %v440
        %v2169 = vmul.f32 %v2068, %v440
        %v2170 = vmul.f32 %v2073, %v440
        %v2171 = vmul.f32 %v2078, %v440
        %v2172 = vmul.f32 %v2083, %v440
        %v2173 = vmul.f32 %v2088, %v440
        %v2174 = vmul.f32 %v2093, %v440
        %v2175 = vmul.f32 %v2098, %v440
        %v2176 = vmul.f32 %v2103, %v440
        %v2177 = vmul.f32 %v2108, %v440
        %v2178 = vmul.f32 %v2113, %v440
        %v2179 = vmul.f32 %v2118, %v440
        %v2180 = vmul.f32 %v2123, %v440
        %v2181 = vmul.f32 %v2128, %v440
        %v2182 = vmul.f32 %v2133, %v440
        %v2183 = vmul.f32 %v2138, %v440
        %v2184 = vmul.f32 %v2143, %v440
        %v2185 = vmul.f32 %v2148, %v440
        %v2186 = vmul.f32 %v2153, %v440
        %2187 = vset.pattern.permute.xlu0 0
        %2188 = vperm.xlu0 %2187, %v1771
        %v2189 = vpop.permute.xlu0 %2188
        %2191 = vset.pattern.permute.xlu0 0
        %2192 = vperm.xlu0 %2191, %v1772
        %v2193 = vpop.permute.xlu0 %2192
        %2195 = vset.pattern.permute.xlu0 0
        %2196 = vperm.xlu0 %2195, %v1773
        %v2197 = vpop.permute.xlu0 %2196
        %2199 = vset.pattern.permute.xlu0 0
        %2200 = vperm.xlu0 %2199, %v1774
        %v2201 = vpop.permute.xlu0 %2200
        %2203 = vset.pattern.permute.xlu0 0
        %2204 = vperm.xlu0 %2203, %v1775
        %v2205 = vpop.permute.xlu0 %2204
        %2207 = vset.pattern.permute.xlu0 0
        %2208 = vperm.xlu0 %2207, %v1776
        %v2209 = vpop.permute.xlu0 %2208
        %2211 = vset.pattern.permute.xlu0 0
        %2212 = vperm.xlu0 %2211, %v1777
        %v2213 = vpop.permute.xlu0 %2212
        %2215 = vset.pattern.permute.xlu0 0
        %2216 = vperm.xlu0 %2215, %v1778
        %v2217 = vpop.permute.xlu0 %2216
        %2219 = vset.pattern.permute.xlu0 0
        %2220 = vperm.xlu0 %2219, %v1779
        %v2221 = vpop.permute.xlu0 %2220
        %2223 = vset.pattern.permute.xlu0 0
        %2224 = vperm.xlu0 %2223, %v1780
        %v2225 = vpop.permute.xlu0 %2224
        %2227 = vset.pattern.permute.xlu0 0
        %2228 = vperm.xlu0 %2227, %v1781
        %v2229 = vpop.permute.xlu0 %2228
        %2231 = vset.pattern.permute.xlu0 0
        %2232 = vperm.xlu0 %2231, %v1782
        %v2233 = vpop.permute.xlu0 %2232
        %2235 = vset.pattern.permute.xlu0 0
        %2236 = vperm.xlu0 %2235, %v1783
        %v2237 = vpop.permute.xlu0 %2236
        %2239 = vset.pattern.permute.xlu0 0
        %2240 = vperm.xlu0 %2239, %v1784
        %v2241 = vpop.permute.xlu0 %2240
        %2243 = vset.pattern.permute.xlu0 0
        %2244 = vperm.xlu0 %2243, %v1785
        %v2245 = vpop.permute.xlu0 %2244
        %2247 = vset.pattern.permute.xlu0 0
        %2248 = vperm.xlu0 %2247, %v1786
        %v2249 = vpop.permute.xlu0 %2248
        %2251 = vset.pattern.permute.xlu0 0
        %2252 = vperm.xlu0 %2251, %v1787
        %v2253 = vpop.permute.xlu0 %2252
        %2255 = vset.pattern.permute.xlu0 0
        %2256 = vperm.xlu0 %2255, %v1788
        %v2257 = vpop.permute.xlu0 %2256
        %2259 = vset.pattern.permute.xlu0 0
        %2260 = vperm.xlu0 %2259, %v1789
        %v2261 = vpop.permute.xlu0 %2260
        %2263 = vset.pattern.permute.xlu0 0
        %2264 = vperm.xlu0 %2263, %v1790
        %v2265 = vpop.permute.xlu0 %2264
        %2267 = vset.pattern.permute.xlu0 0
        %2268 = vperm.xlu0 %2267, %v1791
        %v2269 = vpop.permute.xlu0 %2268
        %2271 = vset.pattern.permute.xlu0 0
        %2272 = vperm.xlu0 %2271, %v1792
        %v2273 = vpop.permute.xlu0 %2272
        %2275 = vset.pattern.permute.xlu0 0
        %2276 = vperm.xlu0 %2275, %v1793
        %v2277 = vpop.permute.xlu0 %2276
        %2279 = vset.pattern.permute.xlu0 0
        %2280 = vperm.xlu0 %2279, %v1794
        %v2281 = vpop.permute.xlu0 %2280
        %2283 = vset.pattern.permute.xlu0 0
        %2284 = vperm.xlu0 %2283, %v1795
        %v2285 = vpop.permute.xlu0 %2284
        %2287 = vset.pattern.permute.xlu0 0
        %2288 = vperm.xlu0 %2287, %v1796
        %v2289 = vpop.permute.xlu0 %2288
        %2291 = vset.pattern.permute.xlu0 0
        %2292 = vperm.xlu0 %2291, %v1797
        %v2293 = vpop.permute.xlu0 %2292
        %2295 = vset.pattern.permute.xlu0 0
        %2296 = vperm.xlu0 %2295, %v1798
        %v2297 = vpop.permute.xlu0 %2296
        %2299 = vset.pattern.permute.xlu0 0
        %2300 = vperm.xlu0 %2299, %v1799
        %v2301 = vpop.permute.xlu0 %2300
        %2303 = vset.pattern.permute.xlu0 0
        %2304 = vperm.xlu0 %2303, %v1800
        %v2305 = vpop.permute.xlu0 %2304
        %2307 = vset.pattern.permute.xlu0 0
        %2308 = vperm.xlu0 %2307, %v1801
        %v2309 = vpop.permute.xlu0 %2308
        %2311 = vset.pattern.permute.xlu0 0
        %2312 = vperm.xlu0 %2311, %v1802
        %v2313 = vpop.permute.xlu0 %2312
        %v2315 = vadd.f32 %v2189, %v2155
        %v2316 = vadd.f32 %v2193, %v2156
        %v2317 = vadd.f32 %v2197, %v2157
        %v2318 = vadd.f32 %v2201, %v2158
        %v2319 = vadd.f32 %v2205, %v2159
        %v2320 = vadd.f32 %v2209, %v2160
        %v2321 = vadd.f32 %v2213, %v2161
        %v2322 = vadd.f32 %v2217, %v2162
        %v2323 = vadd.f32 %v2221, %v2163
        %v2324 = vadd.f32 %v2225, %v2164
        %v2325 = vadd.f32 %v2229, %v2165
        %v2326 = vadd.f32 %v2233, %v2166
        %v2327 = vadd.f32 %v2237, %v2167
        %v2328 = vadd.f32 %v2241, %v2168
        %v2329 = vadd.f32 %v2245, %v2169
        %v2330 = vadd.f32 %v2249, %v2170
        %v2331 = vadd.f32 %v2253, %v2171
        %v2332 = vadd.f32 %v2257, %v2172
        %v2333 = vadd.f32 %v2261, %v2173
        %v2334 = vadd.f32 %v2265, %v2174
        %v2335 = vadd.f32 %v2269, %v2175
        %v2336 = vadd.f32 %v2273, %v2176
        %v2337 = vadd.f32 %v2277, %v2177
        %v2338 = vadd.f32 %v2281, %v2178
        %v2339 = vadd.f32 %v2285, %v2179
        %v2340 = vadd.f32 %v2289, %v2180
        %v2341 = vadd.f32 %v2293, %v2181
        %v2342 = vadd.f32 %v2297, %v2182
        %v2343 = vadd.f32 %v2301, %v2183
        %v2344 = vadd.f32 %v2305, %v2184
        %v2345 = vadd.f32 %v2309, %v2185
        %v2346 = vadd.f32 %v2313, %v2186
        %2363 = vrot.lane.b32.xlu0 %v1659, 1
        %v2364 = vpop.permute.xlu0 %2363
        %2365 = vrot.lane.b32.xlu0 %v1660, 1
        %v2366 = vpop.permute.xlu0 %2365
        %2367 = vrot.lane.b32.xlu0 %v1661, 1
        %v2368 = vpop.permute.xlu0 %2367
        %2369 = vrot.lane.b32.xlu0 %v1662, 1
        %v2370 = vpop.permute.xlu0 %2369
        %2371 = vrot.lane.b32.xlu0 %v1663, 1
        %v2372 = vpop.permute.xlu0 %2371
        %2373 = vrot.lane.b32.xlu0 %v1664, 1
        %v2374 = vpop.permute.xlu0 %2373
        %2375 = vrot.lane.b32.xlu0 %v1665, 1
        %v2376 = vpop.permute.xlu0 %2375
        %2377 = vrot.lane.b32.xlu0 %v1666, 1
        %v2378 = vpop.permute.xlu0 %2377
        %2379 = vrot.lane.b32.xlu0 %v1667, 1
        %v2380 = vpop.permute.xlu0 %2379
        %2381 = vrot.lane.b32.xlu0 %v1668, 1
        %v2382 = vpop.permute.xlu0 %2381
        %2383 = vrot.lane.b32.xlu0 %v1669, 1
        %v2384 = vpop.permute.xlu0 %2383
        %2385 = vrot.lane.b32.xlu0 %v1670, 1
        %v2386 = vpop.permute.xlu0 %2385
        %2387 = vrot.lane.b32.xlu0 %v1671, 1
        %v2388 = vpop.permute.xlu0 %2387
        %2389 = vrot.lane.b32.xlu0 %v1672, 1
        %v2390 = vpop.permute.xlu0 %2389
        %2391 = vrot.lane.b32.xlu0 %v1673, 1
        %v2392 = vpop.permute.xlu0 %2391
        %2393 = vrot.lane.b32.xlu0 %v1674, 1
        %v2394 = vpop.permute.xlu0 %2393
        %v2411 = vsub.f32 %v1755, %v2364
        %v2412 = vsub.f32 %v1756, %v2366
        %v2413 = vsub.f32 %v1757, %v2368
        %v2414 = vsub.f32 %v1758, %v2370
        %v2415 = vsub.f32 %v1759, %v2372
        %v2416 = vsub.f32 %v1760, %v2374
        %v2417 = vsub.f32 %v1761, %v2376
        %v2418 = vsub.f32 %v1762, %v2378
        %v2419 = vsub.f32 %v1763, %v2380
        %v2420 = vsub.f32 %v1764, %v2382
        %v2421 = vsub.f32 %v1765, %v2384
        %v2422 = vsub.f32 %v1766, %v2386
        %v2423 = vsub.f32 %v1767, %v2388
        %v2424 = vsub.f32 %v1768, %v2390
        %v2425 = vsub.f32 %v1769, %v2392
        %v2426 = vsub.f32 %v1770, %v2394
        %2428 = vset.pattern.permute.xlu0 3
        %2429 = vperm.xlu0 %2428, %v2411
        %v2430 = vpop.permute.xlu0 %2429
        %2433 = vset.pattern.permute.xlu0 3
        %2434 = vperm.xlu0 %2433, %v2412
        %v2435 = vpop.permute.xlu0 %2434
        %2438 = vset.pattern.permute.xlu0 3
        %2439 = vperm.xlu0 %2438, %v2413
        %v2440 = vpop.permute.xlu0 %2439
        %2443 = vset.pattern.permute.xlu0 3
        %2444 = vperm.xlu0 %2443, %v2414
        %v2445 = vpop.permute.xlu0 %2444
        %2448 = vset.pattern.permute.xlu0 3
        %2449 = vperm.xlu0 %2448, %v2415
        %v2450 = vpop.permute.xlu0 %2449
        %2453 = vset.pattern.permute.xlu0 3
        %2454 = vperm.xlu0 %2453, %v2416
        %v2455 = vpop.permute.xlu0 %2454
        %2458 = vset.pattern.permute.xlu0 3
        %2459 = vperm.xlu0 %2458, %v2417
        %v2460 = vpop.permute.xlu0 %2459
        %2463 = vset.pattern.permute.xlu0 3
        %2464 = vperm.xlu0 %2463, %v2418
        %v2465 = vpop.permute.xlu0 %2464
        %2468 = vset.pattern.permute.xlu0 3
        %2469 = vperm.xlu0 %2468, %v2419
        %v2470 = vpop.permute.xlu0 %2469
        %2473 = vset.pattern.permute.xlu0 3
        %2474 = vperm.xlu0 %2473, %v2420
        %v2475 = vpop.permute.xlu0 %2474
        %2478 = vset.pattern.permute.xlu0 3
        %2479 = vperm.xlu0 %2478, %v2421
        %v2480 = vpop.permute.xlu0 %2479
        %2483 = vset.pattern.permute.xlu0 3
        %2484 = vperm.xlu0 %2483, %v2422
        %v2485 = vpop.permute.xlu0 %2484
        %2488 = vset.pattern.permute.xlu0 3
        %2489 = vperm.xlu0 %2488, %v2423
        %v2490 = vpop.permute.xlu0 %2489
        %2493 = vset.pattern.permute.xlu0 3
        %2494 = vperm.xlu0 %2493, %v2424
        %v2495 = vpop.permute.xlu0 %2494
        %2498 = vset.pattern.permute.xlu0 3
        %2499 = vperm.xlu0 %2498, %v2425
        %v2500 = vpop.permute.xlu0 %2499
        %2503 = vset.pattern.permute.xlu0 3
        %2504 = vperm.xlu0 %2503, %v2426
        %v2505 = vpop.permute.xlu0 %2504
        %v2507 = vmul.f32 %v2430, %v440
        %v2508 = vmul.f32 %v2435, %v440
        %v2509 = vmul.f32 %v2440, %v440
        %v2510 = vmul.f32 %v2445, %v440
        %v2511 = vmul.f32 %v2450, %v440
        %v2512 = vmul.f32 %v2455, %v440
        %v2513 = vmul.f32 %v2460, %v440
        %v2514 = vmul.f32 %v2465, %v440
        %v2515 = vmul.f32 %v2470, %v440
        %v2516 = vmul.f32 %v2475, %v440
        %v2517 = vmul.f32 %v2480, %v440
        %v2518 = vmul.f32 %v2485, %v440
        %v2519 = vmul.f32 %v2490, %v440
        %v2520 = vmul.f32 %v2495, %v440
        %v2521 = vmul.f32 %v2500, %v440
        %v2522 = vmul.f32 %v2505, %v440
        %2523 = vset.pattern.permute.xlu0 2
        %2524 = vperm.xlu0 %2523, %v1659
        %v2525 = vpop.permute.xlu0 %2524
        %2527 = vset.pattern.permute.xlu0 2
        %2528 = vperm.xlu0 %2527, %v1660
        %v2529 = vpop.permute.xlu0 %2528
        %2531 = vset.pattern.permute.xlu0 2
        %2532 = vperm.xlu0 %2531, %v1661
        %v2533 = vpop.permute.xlu0 %2532
        %2535 = vset.pattern.permute.xlu0 2
        %2536 = vperm.xlu0 %2535, %v1662
        %v2537 = vpop.permute.xlu0 %2536
        %2539 = vset.pattern.permute.xlu0 2
        %2540 = vperm.xlu0 %2539, %v1663
        %v2541 = vpop.permute.xlu0 %2540
        %2543 = vset.pattern.permute.xlu0 2
        %2544 = vperm.xlu0 %2543, %v1664
        %v2545 = vpop.permute.xlu0 %2544
        %2547 = vset.pattern.permute.xlu0 2
        %2548 = vperm.xlu0 %2547, %v1665
        %v2549 = vpop.permute.xlu0 %2548
        %2551 = vset.pattern.permute.xlu0 2
        %2552 = vperm.xlu0 %2551, %v1666
        %v2553 = vpop.permute.xlu0 %2552
        %2555 = vset.pattern.permute.xlu0 2
        %2556 = vperm.xlu0 %2555, %v1667
        %v2557 = vpop.permute.xlu0 %2556
        %2559 = vset.pattern.permute.xlu0 2
        %2560 = vperm.xlu0 %2559, %v1668
        %v2561 = vpop.permute.xlu0 %2560
        %2563 = vset.pattern.permute.xlu0 2
        %2564 = vperm.xlu0 %2563, %v1669
        %v2565 = vpop.permute.xlu0 %2564
        %2567 = vset.pattern.permute.xlu0 2
        %2568 = vperm.xlu0 %2567, %v1670
        %v2569 = vpop.permute.xlu0 %2568
        %2571 = vset.pattern.permute.xlu0 2
        %2572 = vperm.xlu0 %2571, %v1671
        %v2573 = vpop.permute.xlu0 %2572
        %2575 = vset.pattern.permute.xlu0 2
        %2576 = vperm.xlu0 %2575, %v1672
        %v2577 = vpop.permute.xlu0 %2576
        %2579 = vset.pattern.permute.xlu0 2
        %2580 = vperm.xlu0 %2579, %v1673
        %v2581 = vpop.permute.xlu0 %2580
        %2583 = vset.pattern.permute.xlu0 2
        %2584 = vperm.xlu0 %2583, %v1674
        %v2585 = vpop.permute.xlu0 %2584
        %v2587 = vadd.f32 %v2525, %v2507
        %v2588 = vadd.f32 %v2529, %v2508
        %v2589 = vadd.f32 %v2533, %v2509
        %v2590 = vadd.f32 %v2537, %v2510
        %v2591 = vadd.f32 %v2541, %v2511
        %v2592 = vadd.f32 %v2545, %v2512
        %v2593 = vadd.f32 %v2549, %v2513
        %v2594 = vadd.f32 %v2553, %v2514
        %v2595 = vadd.f32 %v2557, %v2515
        %v2596 = vadd.f32 %v2561, %v2516
        %v2597 = vadd.f32 %v2565, %v2517
        %v2598 = vadd.f32 %v2569, %v2518
        %v2599 = vadd.f32 %v2573, %v2519
        %v2600 = vadd.f32 %v2577, %v2520
        %v2601 = vadd.f32 %v2581, %v2521
        %v2602 = vadd.f32 %v2585, %v2522
        %v2603 = vmul.f32 %v266, %v2315
        %v2604 = vmul.f32 %v267, %v2316
        %v2605 = vmul.f32 %v268, %v2317
        %v2606 = vmul.f32 %v269, %v2318
        %v2607 = vmul.f32 %v270, %v2319
        %v2608 = vmul.f32 %v271, %v2320
        %v2609 = vmul.f32 %v272, %v2321
        %v2610 = vmul.f32 %v273, %v2322
        %v2611 = vmul.f32 %v274, %v2323
        %v2612 = vmul.f32 %v275, %v2324
        %v2613 = vmul.f32 %v276, %v2325
        %v2614 = vmul.f32 %v277, %v2326
        %v2615 = vmul.f32 %v278, %v2327
        %v2616 = vmul.f32 %v279, %v2328
        %v2617 = vmul.f32 %v280, %v2329
        %v2618 = vmul.f32 %v281, %v2330
        %v2619 = vmul.f32 %v282, %v2331
        %v2620 = vmul.f32 %v283, %v2332
        %v2621 = vmul.f32 %v284, %v2333
        %v2622 = vmul.f32 %v285, %v2334
        %v2623 = vmul.f32 %v286, %v2335
        %v2624 = vmul.f32 %v287, %v2336
        %v2625 = vmul.f32 %v288, %v2337
        %v2626 = vmul.f32 %v289, %v2338
        %v2627 = vmul.f32 %v290, %v2339
        %v2628 = vmul.f32 %v291, %v2340
        %v2629 = vmul.f32 %v292, %v2341
        %v2630 = vmul.f32 %v293, %v2342
        %v2631 = vmul.f32 %v294, %v2343
        %v2632 = vmul.f32 %v295, %v2344
        %v2633 = vmul.f32 %v296, %v2345
        %v2634 = vmul.f32 %v297, %v2346
        %v2635 = vadd.f32 %v2603, %v2587
        %v2636 = vadd.f32 %v2604, %v2588
        %v2637 = vadd.f32 %v2605, %v2589
        %v2638 = vadd.f32 %v2606, %v2590
        %v2639 = vadd.f32 %v2607, %v2591
        %v2640 = vadd.f32 %v2608, %v2592
        %v2641 = vadd.f32 %v2609, %v2593
        %v2642 = vadd.f32 %v2610, %v2594
        %v2643 = vadd.f32 %v2611, %v2595
        %v2644 = vadd.f32 %v2612, %v2596
        %v2645 = vadd.f32 %v2613, %v2597
        %v2646 = vadd.f32 %v2614, %v2598
        %v2647 = vadd.f32 %v2615, %v2599
        %v2648 = vadd.f32 %v2616, %v2600
        %v2649 = vadd.f32 %v2617, %v2601
        %v2650 = vadd.f32 %v2618, %v2602
        %v2651 = vadd.f32 %v2619, %v2587
        %v2652 = vadd.f32 %v2620, %v2588
        %v2653 = vadd.f32 %v2621, %v2589
        %v2654 = vadd.f32 %v2622, %v2590
        %v2655 = vadd.f32 %v2623, %v2591
        %v2656 = vadd.f32 %v2624, %v2592
        %v2657 = vadd.f32 %v2625, %v2593
        %v2658 = vadd.f32 %v2626, %v2594
        %v2659 = vadd.f32 %v2627, %v2595
        %v2660 = vadd.f32 %v2628, %v2596
        %v2661 = vadd.f32 %v2629, %v2597
        %v2662 = vadd.f32 %v2630, %v2598
        %v2663 = vadd.f32 %v2631, %v2599
        %v2664 = vadd.f32 %v2632, %v2600
        %v2665 = vadd.f32 %v2633, %v2601
        %v2666 = vadd.f32 %v2634, %v2602
        %v2667 = vmax.f32 %v2635, 0.0
        %v2668 = vmax.f32 %v2636, 0.0
        %v2669 = vmax.f32 %v2637, 0.0
        %v2670 = vmax.f32 %v2638, 0.0
        %v2671 = vmax.f32 %v2639, 0.0
        %v2672 = vmax.f32 %v2640, 0.0
        %v2673 = vmax.f32 %v2641, 0.0
        %v2674 = vmax.f32 %v2642, 0.0
        %v2675 = vmax.f32 %v2643, 0.0
        %v2676 = vmax.f32 %v2644, 0.0
        %v2677 = vmax.f32 %v2645, 0.0
        %v2678 = vmax.f32 %v2646, 0.0
        %v2679 = vmax.f32 %v2647, 0.0
        %v2680 = vmax.f32 %v2648, 0.0
        %v2681 = vmax.f32 %v2649, 0.0
        %v2682 = vmax.f32 %v2650, 0.0
        %v2683 = vmax.f32 %v2651, 0.0
        %v2684 = vmax.f32 %v2652, 0.0
        %v2685 = vmax.f32 %v2653, 0.0
        %v2686 = vmax.f32 %v2654, 0.0
        %v2687 = vmax.f32 %v2655, 0.0
        %v2688 = vmax.f32 %v2656, 0.0
        %v2689 = vmax.f32 %v2657, 0.0
        %v2690 = vmax.f32 %v2658, 0.0
        %v2691 = vmax.f32 %v2659, 0.0
        %v2692 = vmax.f32 %v2660, 0.0
        %v2693 = vmax.f32 %v2661, 0.0
        %v2694 = vmax.f32 %v2662, 0.0
        %v2695 = vmax.f32 %v2663, 0.0
        %v2696 = vmax.f32 %v2664, 0.0
        %v2697 = vmax.f32 %v2665, 0.0
        %v2698 = vmax.f32 %v2666, 0.0
        %2699 = vst [vmem:[%s257] sm:$0xff] %v2667
        %2700 = vst [vmem:[%s257 + $0x8] sm:$0xff] %v2668
        %2701 = vst [vmem:[%s257 + $0x10] sm:$0xff] %v2669
        %2702 = vst [vmem:[%s257 + $0x18] sm:$0xff] %v2670
        %2703 = vst [vmem:[%s257 + $0x20] sm:$0xff] %v2671
        %2704 = vst [vmem:[%s257 + $0x28] sm:$0xff] %v2672
        %2705 = vst [vmem:[%s257 + $0x30] sm:$0xff] %v2673
        %2706 = vst [vmem:[%s257 + $0x38] sm:$0xff] %v2674
        %2707 = vst [vmem:[%s257 + $0x40] sm:$0xff] %v2675
        %2708 = vst [vmem:[%s257 + $0x48] sm:$0xff] %v2676
        %2709 = vst [vmem:[%s257 + $0x50] sm:$0xff] %v2677
        %2710 = vst [vmem:[%s257 + $0x58] sm:$0xff] %v2678
        %2711 = vst [vmem:[%s257 + $0x60] sm:$0xff] %v2679
        %2712 = vst [vmem:[%s257 + $0x68] sm:$0xff] %v2680
        %2713 = vst [vmem:[%s257 + $0x70] sm:$0xff] %v2681
        %2714 = vst [vmem:[%s257 + $0x78] sm:$0xff] %v2682
        %2715 = vst [vmem:[%s257 + $0x80] sm:$0xff] %v2683
        %2716 = vst [vmem:[%s257 + $0x88] sm:$0xff] %v2684
        %2717 = vst [vmem:[%s257 + $0x90] sm:$0xff] %v2685
        %2718 = vst [vmem:[%s257 + $0x98] sm:$0xff] %v2686
        %2719 = vst [vmem:[%s257 + $0xa0] sm:$0xff] %v2687
        %2720 = vst [vmem:[%s257 + $0xa8] sm:$0xff] %v2688
        %2721 = vst [vmem:[%s257 + $0xb0] sm:$0xff] %v2689
        %2722 = vst [vmem:[%s257 + $0xb8] sm:$0xff] %v2690
        %2723 = vst [vmem:[%s257 + $0xc0] sm:$0xff] %v2691
        %2724 = vst [vmem:[%s257 + $0xc8] sm:$0xff] %v2692
        %2725 = vst [vmem:[%s257 + $0xd0] sm:$0xff] %v2693
        %2726 = vst [vmem:[%s257 + $0xd8] sm:$0xff] %v2694
        %2727 = vst [vmem:[%s257 + $0xe0] sm:$0xff] %v2695
        %2728 = vst [vmem:[%s257 + $0xe8] sm:$0xff] %v2696
        %2729 = vst [vmem:[%s257 + $0xf0] sm:$0xff] %v2697
        %2730 = vst [vmem:[%s257 + $0xf8] sm:$0xff] %v2698
        %s2731 = sand.u32 %s124, 1
        %s2732 = scalar_lea.sflag [#allocation5], %s2731
        %s2733 = sand.u32 %s124, 1
        %s2734 = smul.addr %s2733, 256
        %s2735 = scalar_lea.vmem [#allocation6], %s2734
        // Predicated region
        $region41: #{tpu_custom_call.1} parent=35 // pred_check
          %p2736 = pneg %p134
        $region42: #{tpu_custom_call.1} parent=35 // pred_check_branch
          %2738 = sbr.rel (%p2736) target = $region44
        $region43: #{tpu_custom_call.1} parent=35 // pred_region
          #allocation10 [shape = 'u32[6]{0}', space=smem, size = 0x18, scoped, tag = 'DMA stride descriptor']
          %s2739 = smul.u32 16, %s22
          %s2741 = ssub.s32 4096, 4096
          %2742 = vsyncadd %s2732, %s2741
          %s2743 = smul.addr %s2739, 128
          %s2744 = scalar_lea.hbm %s4, %s2743
          %s2746 = sshll.u32 1, 14
          %s2747 = sxor.u32 4294967295, %s2746
          %s2750 = sshll.u32 7, 18
          %s2751 = sxor.u32 4294967295, %s2750
          %s2752 = sand.u32 0, %s2751
          %s2754 = sor.u32 %s2752, 0
          %s2755 = sshll.u32 %s2735, 4
          %s2756 = int_to_ptr.vmem [resolvable:$true] %s2755
          %2762 = sst [smem:[#allocation10]] 2048
          %s2763 = scalar_lea.smem [#allocation10], 1
          %2764 = sst [smem:[%s2763]] 4096
          %s2765 = scalar_lea.smem [#allocation10], 2
          %2766 = sst [smem:[%s2765]] 16
          %s2767 = scalar_lea.smem [#allocation10], 3
          %2768 = sst [smem:[%s2767]] 128
          %s2769 = scalar_lea.smem [#allocation10], 4
          %2770 = sst [smem:[%s2769]] 128
          %s2771 = scalar_lea.smem [#allocation10], 5
          %2772 = sst [smem:[%s2771]] 8
          %2774 = dma.general %s2756, 4096, %s2744, %s2732, 131072, [#allocation10], %s2754, 0
        $region44: #{tpu_custom_call.1} parent=35 // pred_fallthru
          _
      $region36: #{tpu_custom_call.1} parent=5 // pred_fallthru
        _
      %p2775 = scmp.le.s32.totalorder 2, %s17
      // Predicated region
      $region45: #{tpu_custom_call.1} parent=5 // pred_check
        %p2776 = pneg %p2775
      $region46: #{tpu_custom_call.1} parent=5 // pred_check_branch
        %2778 = sbr.rel (%p2776) target = $region48
      $region47: #{tpu_custom_call.1} parent=5 // pred_region
        %s2779 = ssub.s32 %s17, 2
        // Predicated region
        $region49: #{tpu_custom_call.1} parent=47 // pred_check
          %p2780 = pneg %p140
        $region50: #{tpu_custom_call.1} parent=47 // pred_check_branch
          %2782 = sbr.rel (%p2780) target = $region52
        $region51: #{tpu_custom_call.1} parent=47 // pred_region
          %s2783 = sand.u32 %s125, 1
          %s2784 = scalar_lea.sflag [#allocation5], %s2783
          %s2785 = sand.u32 %s125, 1
          %s2786 = smul.addr %s2785, 256
          %s2787 = scalar_lea.vmem [#allocation6], %s2786
          %2788 = dma.done %s2784, 4096
        $region52: #{tpu_custom_call.1} parent=47 // pred_fallthru
          _
      $region48: #{tpu_custom_call.1} parent=5 // pred_fallthru
        _
    $region6: #{tpu_custom_call.1} parent=1 // loop_footer
      %s21 = sadd.s32 1, %s17
    $region7: #{tpu_custom_call.1} parent=1 // loop_footer_branch
      %16 = sbr.rel target = $region3
    $region8: #{tpu_custom_call.1} parent=1 // loop_exit
      _
    %2789 = vsyncpa [#allocation4], 1
    %s2790 = scalar_lea.sflag [#allocation4], 1
    %2791 = vsyncpa %s2790, 1
    %2792 = vsyncpa [#allocation5], 1
    %s2793 = scalar_lea.sflag [#allocation5], 1
    %2794 = vsyncpa %s2793, 1

</llo_original>
